<compile_context>
chip_gen: v6e
topology: v6e:2x2x1
jax: 0.10.0
libtpu: 0.0.40
codegen_flags: <defaults>
</compile_context>

<pallas_src>
import functools

import jax
import jax.numpy as jnp
import numpy as np
from jax import lax
from jax.experimental import pallas as pl
from jax.experimental.pallas import tpu as pltpu


def _multichain_kernel(xcol_ref, mask_ref, w0_ref, wd_ref, b_ref, o_ref, *,
                       Kmax, depth, CC):
    """One grid step == `chains_per_step` full conv chains, all layers fused.

    xcol_ref: (Kmax*cin_pad, W)        shared layer-0 im2col slab (built once in XLA)
    mask_ref: (Kmax, 1, W)             per-tap validity masks ('same' pad + sample halo)
    w0_ref  : (1, CC, Kmax*cin_pad)    layer-0 weights, this step's chains stacked on rows
    wd_ref  : (1, (depth-1)*Kmax, CC, CC)  deeper layers, block-diagonal per-tap matrices
    b_ref   : (1, depth, CC, W)        biases pre-broadcast to full lane width
    o_ref   : (1, CC, W)               lane-dense output block
    with CC = chains_per_step * Cout and W = N * L (128 lanes per row here).
    """
    Hmax = Kmax // 2
    W = o_ref.shape[-1]

    # ---- layer 0: one batched MXU matmul covering every chain in this step ----
    a = jnp.dot(w0_ref[0], xcol_ref[...], preferred_element_type=jnp.float32)
    a = jnp.maximum(a + b_ref[0, 0], 0.0)                         # (CC, W)

    # ---- deeper layers: K-tap roll-and-accumulate, one tap live at a time -----
    for d in range(1, depth):
        acc = b_ref[0, d]                                         # (CC, W), start at bias
        for k in range(Kmax):
            if k == Hmax:                    # center tap: no shift, mask is all-ones
                a_tap = a
            else:                            # XLU roll + VPU mask
                a_tap = pltpu.roll(a, shift=(Hmax - k) % W, axis=1) * mask_ref[k]
            w_k = wd_ref[0, (d - 1) * Kmax + k]                   # aligned (CC, CC) load
            acc = acc + jnp.dot(w_k, a_tap, preferred_element_type=jnp.float32)
        a = jnp.maximum(acc, 0.0)

    o_ref[0] = a.astype(o_ref.dtype)         # unmasked full-width (CC, 128) store


def _build_masks(N, L, Kmax):
    """masks[k, 0, n*L + l] = 1 iff input index l + (k - Kmax//2) lies inside [0, L)."""
    Hmax = Kmax // 2
    l_idx = np.arange(N * L) % L
    m = np.stack([((l_idx + (k - Hmax)) >= 0) & ((l_idx + (k - Hmax)) < L)
                  for k in range(Kmax)]).astype(np.float32)        # (Kmax, N*L)
    return jnp.asarray(m[:, None, :])                              # (Kmax, 1, N*L)


def _layer0_im2col(x, Kmax, cin_pad):
    """(N, Cin, L) -> (Kmax*cin_pad, N*L) shared layer-0 im2col slab (runs in XLA)."""
    N, Cin, L = x.shape
    Hmax = Kmax // 2
    xp = jnp.pad(x.astype(jnp.float32),
                 ((0, 0), (0, cin_pad - Cin), (Hmax, Hmax)))        # (N, cin_pad, L+2H)
    taps = jnp.stack([xp[:, :, k:k + L] for k in range(Kmax)], axis=0)
    # (Kmax, N, cin_pad, L) -> (Kmax, cin_pad, N, L) -> (Kmax*cin_pad, N*L)
    return jnp.transpose(taps, (0, 2, 1, 3)).reshape(Kmax * cin_pad, N * L)


def _pack_params(params, Kmax, cin_pad, chains_per_step, W):
    """Pack per-chain Conv1d weights/biases into the fused kernel's layouts."""
    num_chains = len(params)
    depth = len(params[0])
    Cout = int(params[0][0][0].shape[0])
    CC = chains_per_step * Cout
    num_steps = num_chains // chains_per_step
    n_deep = max(depth - 1, 1)

    w0 = np.zeros((num_steps, CC, Kmax * cin_pad), np.float32)
    wd = np.zeros((num_steps, n_deep * Kmax, CC, CC), np.float32)
    b = np.zeros((num_steps, depth, CC, 1), np.float32)

    for c, chain in enumerate(params):
        s, j = divmod(c, chains_per_step)
        for d, (wt, bias) in enumerate(chain):
            wt = np.asarray(wt, np.float32)        # (Cout, Cin_d, K)
            bias = np.asarray(bias, np.float32)    # (Cout,)
            K = wt.shape[-1]
            assert K % 2 == 1, "odd kernel sizes required for exact 'same' padding"
            kpad = (Kmax - K) // 2                 # symmetric zero-pad of taps to Kmax
            b[s, d, j * Cout:(j + 1) * Cout, 0] = bias
            if d == 0:
                for k in range(K):
                    col = (k + kpad) * cin_pad
                    w0[s, j * Cout:(j + 1) * Cout, col:col + wt.shape[1]] = wt[:, :, k]
            else:
                for k in range(K):
                    wd[s, (d - 1) * Kmax + (k + kpad),
                       j * Cout:(j + 1) * Cout,
                       j * Cout:(j + 1) * Cout] = wt[:, :, k]      # block-diag per tap

    b = np.broadcast_to(b, (num_steps, depth, CC, W)).copy()       # lane-dense biases
    return jnp.asarray(w0), jnp.asarray(wd), jnp.asarray(b)


def _default_chains_per_step(num_chains):
    """One grid step per TensorCore: single-TC chips (v5e/v6e) -> all chains in one
    step (zero grid-step overhead); 2-TC chips (v7x, v4/v5p megacore) -> 2 per step."""
    try:
        kind = jax.devices()[0].device_kind.lower()
    except Exception:  # pragma: no cover - defensive
        kind = ""
    if any(t in kind for t in ("lite", "v5e", "v6e")):
        return num_chains
    return 2 if num_chains % 2 == 0 else 1


def make_cnn1d_multichain(params, N, L, chains_per_step=None):
    """Pack the weights once and return a jitted forward: (N,Cin,L)->(N,chains*Cout,L)."""
    num_chains = len(params)
    depth = len(params[0])
    Cout = int(params[0][0][0].shape[0])
    Cin = int(params[0][0][0].shape[1])
    ksizes = [int(chain[0][0].shape[-1]) for chain in params]
    assert all(k % 2 == 1 for k in ksizes), "odd kernel sizes required for 'same'"
    Kmax = max(ksizes)

    if chains_per_step is None:
        chains_per_step = _default_chains_per_step(num_chains)
    assert num_chains % chains_per_step == 0
    num_steps = num_chains // chains_per_step
    CC = chains_per_step * Cout
    W = N * L
    cin_pad = max(8, ((Cin + 7) // 8) * 8)        # sublane-align the layer-0 slab
    Kc = Kmax * cin_pad
    n_deep = max(depth - 1, 1)

    w0, wd, b = _pack_params(params, Kmax, cin_pad, chains_per_step, W)
    masks = _build_masks(N, L, Kmax)

    kernel = functools.partial(_multichain_kernel, Kmax=Kmax, depth=depth, CC=CC)
    conv_call = pl.pallas_call(
        kernel,
        grid=(num_steps,),
        in_specs=[
            pl.BlockSpec((Kc, W), lambda s: (0, 0)),                    # shared im2col slab
            pl.BlockSpec((Kmax, 1, W), lambda s: (0, 0, 0)),            # shared tap masks
            pl.BlockSpec((1, CC, Kc), lambda s: (s, 0, 0)),             # layer-0 weights
            pl.BlockSpec((1, n_deep * Kmax, CC, CC), lambda s: (s, 0, 0, 0)),  # deep weights
            pl.BlockSpec((1, depth, CC, W), lambda s: (s, 0, 0, 0)),    # biases
        ],
        out_specs=pl.BlockSpec((1, CC, W), lambda s: (s, 0, 0)),
        out_shape=jax.ShapeDtypeStruct((num_steps, CC, W), jnp.float32),
        compiler_params=pltpu.CompilerParams(
            dimension_semantics=("parallel",)),     # v7x: one step per TensorCore
    )

    @jax.jit
    def forward(x):
        xcol = _layer0_im2col(x, Kmax, cin_pad)                         # (Kc, N*L)
        out = conv_call(xcol, masks, w0, wd, b)                         # (steps, CC, N*L)
        out = out.reshape(num_steps, chains_per_step, Cout, N, L)
        # (steps, cps, Cout, N, L) -> (N, steps*cps*Cout, L) == torch.cat(dim=1) order
        return jnp.transpose(out, (3, 0, 1, 2, 4)).reshape(N, num_chains * Cout, L)

    return forward


def init_params(key, depth=3, input_filters=2, output_filters=16,
                kernel_sizes=(3, 5, 7, 9)):
    """Deterministic synthetic params; shapes mirror the PyTorch module."""
    params = []
    for ksz in kernel_sizes:
        in_ch = [input_filters] + [output_filters] * (depth - 1)
        chain = []
        for d in range(depth):
            key, kw, kb = jax.random.split(key, 3)
            w = 0.1 * jax.random.normal(kw, (output_filters, in_ch[d], ksz),
                                        dtype=jnp.float32)
            bb = 0.1 * jax.random.normal(kb, (output_filters,), dtype=jnp.float32)
            chain.append((w, bb))
        params.append(chain)
    return params


def _reference_forward(x, params):
    """Pure-JAX reference (lax conv) for correctness checking."""
    outs = []
    for chain in params:
        y = x
        for (w, bb) in chain:
            dn = lax.conv_dimension_numbers(y.shape, w.shape, ("NCH", "OIH", "NCH"))
            y = lax.conv_general_dilated(y, w, window_strides=(1,), padding="SAME",
                                         dimension_numbers=dn)
            y = jax.nn.relu(y + bb[None, :, None])
        outs.append(y)
    return jnp.concatenate(outs, axis=1)


if __name__ == "__main__":
    key = jax.random.PRNGKey(0)
    k_x, k_p = jax.random.split(key)

    N, C_in, L = 2, 2, 64            # N*L = 128 lanes -> one full vreg row per channel
    x = jax.random.normal(k_x, (N, C_in, L), dtype=jnp.float32)

    params = init_params(k_p, depth=3, input_filters=C_in,
                         output_filters=16, kernel_sizes=(3, 5, 7, 9))

    forward = make_cnn1d_multichain(params, N=N, L=L)
    out = jax.block_until_ready(forward(x))
    ref = jax.block_until_ready(_reference_forward(x, params))

    assert out.shape == (N, 4 * 16, L), out.shape
    np.testing.assert_allclose(np.asarray(out), np.asarray(ref),
                               rtol=5e-4, atol=5e-4)

    print("KERNEL_OK")
</pallas_src>

<mosaic_0001>
module attributes {stable_mosaic.version = 11 : i64} {
  func.func @_multichain_kernel(%arg0: i32, %arg1: memref<72x128xf32, #tpu.memory_space<vmem>>, %arg2: memref<9x1x128xf32, #tpu.memory_space<vmem>>, %arg3: memref<1x32x72xf32, #tpu.memory_space<vmem>>, %arg4: memref<1x18x32x32xf32, #tpu.memory_space<vmem>>, %arg5: memref<1x3x32x128xf32, #tpu.memory_space<vmem>>, %arg6: memref<1x32x128xf32, #tpu.memory_space<vmem>>) attributes {dimension_semantics = [#tpu.dimension_semantics<parallel>], iteration_bounds = array<i64: 2>, scalar_prefetch = 0 : i64, scratch_operands = 0 : i64, tpu.core_type = #tpu.core_type<tc>, window_params = [{pipeline_mode = #tpu.pipeline_mode<synchronous>, transform_indices = @transform_0, window_bounds = array<i64: 72, 128>}, {pipeline_mode = #tpu.pipeline_mode<synchronous>, transform_indices = @transform_1, window_bounds = array<i64: 9, 1, 128>}, {transform_indices = @transform_2, window_bounds = array<i64: 1, 32, 72>}, {transform_indices = @transform_3, window_bounds = array<i64: 1, 18, 32, 32>}, {transform_indices = @transform_4, window_bounds = array<i64: 1, 3, 32, 128>}, {transform_indices = @transform_5, window_bounds = array<i64: 1, 32, 128>}]} {
    %c0 = arith.constant 0 : index
    %c0_0 = arith.constant 0 : index
    %c0_1 = arith.constant 0 : index
    %0 = vector.load %arg3[%c0, %c0_0, %c0_1] : memref<1x32x72xf32, #tpu.memory_space<vmem>>, vector<1x32x72xf32>
    %1 = vector.shape_cast %0 : vector<1x32x72xf32> to vector<32x72xf32>
    %c0_2 = arith.constant 0 : index
    %c0_3 = arith.constant 0 : index
    %2 = vector.load %arg1[%c0_2, %c0_3] : memref<72x128xf32, #tpu.memory_space<vmem>>, vector<72x128xf32>
    %cst = arith.constant dense<0.000000e+00> : vector<32x128xf32>
    %3 = tpu.matmul %1, %2, %cst {dimension_numbers = #tpu.dot_dimension_numbers<[1], [0], [0], [1], [0, 0, 1, 1], [], []>} : vector<32x72xf32>, vector<72x128xf32>, vector<32x128xf32> -> vector<32x128xf32>
    %c0_4 = arith.constant 0 : index
    %c0_5 = arith.constant 0 : index
    %c0_6 = arith.constant 0 : index
    %c0_7 = arith.constant 0 : index
    %4 = vector.load %arg5[%c0_4, %c0_5, %c0_6, %c0_7] : memref<1x3x32x128xf32, #tpu.memory_space<vmem>>, vector<1x1x32x128xf32>
    %5 = vector.shape_cast %4 : vector<1x1x32x128xf32> to vector<32x128xf32>
    %6 = arith.addf %3, %5 : vector<32x128xf32>
    %cst_8 = arith.constant 0.000000e+00 : f32
    %7 = vector.broadcast %cst_8 : f32 to vector<32x128xf32>
    %8 = arith.maximumf %6, %7 : vector<32x128xf32>
    %c0_9 = arith.constant 0 : index
    %c1 = arith.constant 1 : index
    %c0_10 = arith.constant 0 : index
    %c0_11 = arith.constant 0 : index
    %9 = vector.load %arg5[%c0_9, %c1, %c0_10, %c0_11] : memref<1x3x32x128xf32, #tpu.memory_space<vmem>>, vector<1x1x32x128xf32>
    %10 = vector.shape_cast %9 : vector<1x1x32x128xf32> to vector<32x128xf32>
    %c4_i32 = arith.constant 4 : i32
    %11 = tpu.dynamic_rotate %8 by %c4_i32 dim 1 : vector<32x128xf32>, i32 -> vector<32x128xf32>
    %c0_12 = arith.constant 0 : index
    %c0_13 = arith.constant 0 : index
    %c0_14 = arith.constant 0 : index
    %12 = vector.load %arg2[%c0_12, %c0_13, %c0_14] : memref<9x1x128xf32, #tpu.memory_space<vmem>>, vector<1x1x128xf32>
    %13 = vector.shape_cast %12 : vector<1x1x128xf32> to vector<1x128xf32>
    %14 = vector.broadcast %13 : vector<1x128xf32> to vector<32x128xf32>
    %15 = arith.mulf %11, %14 : vector<32x128xf32>
    %c0_15 = arith.constant 0 : index
    %c0_16 = arith.constant 0 : index
    %c0_17 = arith.constant 0 : index
    %c0_18 = arith.constant 0 : index
    %16 = vector.load %arg4[%c0_15, %c0_16, %c0_17, %c0_18] : memref<1x18x32x32xf32, #tpu.memory_space<vmem>>, vector<1x1x32x32xf32>
    %17 = vector.shape_cast %16 : vector<1x1x32x32xf32> to vector<32x32xf32>
    %cst_19 = arith.constant dense<0.000000e+00> : vector<32x128xf32>
    %18 = tpu.matmul %17, %15, %cst_19 {dimension_numbers = #tpu.dot_dimension_numbers<[1], [0], [0], [1], [0, 0, 1, 1], [], []>} : vector<32x32xf32>, vector<32x128xf32>, vector<32x128xf32> -> vector<32x128xf32>
    %19 = arith.addf %10, %18 : vector<32x128xf32>
    %c3_i32 = arith.constant 3 : i32
    %20 = tpu.dynamic_rotate %8 by %c3_i32 dim 1 : vector<32x128xf32>, i32 -> vector<32x128xf32>
    %c1_20 = arith.constant 1 : index
    %c0_21 = arith.constant 0 : index
    %c0_22 = arith.constant 0 : index
    %21 = vector.load %arg2[%c1_20, %c0_21, %c0_22] : memref<9x1x128xf32, #tpu.memory_space<vmem>>, vector<1x1x128xf32>
    %22 = vector.shape_cast %21 : vector<1x1x128xf32> to vector<1x128xf32>
    %23 = vector.broadcast %22 : vector<1x128xf32> to vector<32x128xf32>
    %24 = arith.mulf %20, %23 : vector<32x128xf32>
    %c0_23 = arith.constant 0 : index
    %c1_24 = arith.constant 1 : index
    %c0_25 = arith.constant 0 : index
    %c0_26 = arith.constant 0 : index
    %25 = vector.load %arg4[%c0_23, %c1_24, %c0_25, %c0_26] : memref<1x18x32x32xf32, #tpu.memory_space<vmem>>, vector<1x1x32x32xf32>
    %26 = vector.shape_cast %25 : vector<1x1x32x32xf32> to vector<32x32xf32>
    %cst_27 = arith.constant dense<0.000000e+00> : vector<32x128xf32>
    %27 = tpu.matmul %26, %24, %cst_27 {dimension_numbers = #tpu.dot_dimension_numbers<[1], [0], [0], [1], [0, 0, 1, 1], [], []>} : vector<32x32xf32>, vector<32x128xf32>, vector<32x128xf32> -> vector<32x128xf32>
    %28 = arith.addf %19, %27 : vector<32x128xf32>
    %c2_i32 = arith.constant 2 : i32
    %29 = tpu.dynamic_rotate %8 by %c2_i32 dim 1 : vector<32x128xf32>, i32 -> vector<32x128xf32>
    %c2 = arith.constant 2 : index
    %c0_28 = arith.constant 0 : index
    %c0_29 = arith.constant 0 : index
    %30 = vector.load %arg2[%c2, %c0_28, %c0_29] : memref<9x1x128xf32, #tpu.memory_space<vmem>>, vector<1x1x128xf32>
    %31 = vector.shape_cast %30 : vector<1x1x128xf32> to vector<1x128xf32>
    %32 = vector.broadcast %31 : vector<1x128xf32> to vector<32x128xf32>
    %33 = arith.mulf %29, %32 : vector<32x128xf32>
    %c0_30 = arith.constant 0 : index
    %c2_31 = arith.constant 2 : index
    %c0_32 = arith.constant 0 : index
    %c0_33 = arith.constant 0 : index
    %34 = vector.load %arg4[%c0_30, %c2_31, %c0_32, %c0_33] : memref<1x18x32x32xf32, #tpu.memory_space<vmem>>, vector<1x1x32x32xf32>
    %35 = vector.shape_cast %34 : vector<1x1x32x32xf32> to vector<32x32xf32>
    %cst_34 = arith.constant dense<0.000000e+00> : vector<32x128xf32>
    %36 = tpu.matmul %35, %33, %cst_34 {dimension_numbers = #tpu.dot_dimension_numbers<[1], [0], [0], [1], [0, 0, 1, 1], [], []>} : vector<32x32xf32>, vector<32x128xf32>, vector<32x128xf32> -> vector<32x128xf32>
    %37 = arith.addf %28, %36 : vector<32x128xf32>
    %c1_i32 = arith.constant 1 : i32
    %38 = tpu.dynamic_rotate %8 by %c1_i32 dim 1 : vector<32x128xf32>, i32 -> vector<32x128xf32>
    %c3 = arith.constant 3 : index
    %c0_35 = arith.constant 0 : index
    %c0_36 = arith.constant 0 : index
    %39 = vector.load %arg2[%c3, %c0_35, %c0_36] : memref<9x1x128xf32, #tpu.memory_space<vmem>>, vector<1x1x128xf32>
    %40 = vector.shape_cast %39 : vector<1x1x128xf32> to vector<1x128xf32>
    %41 = vector.broadcast %40 : vector<1x128xf32> to vector<32x128xf32>
    %42 = arith.mulf %38, %41 : vector<32x128xf32>
    %c0_37 = arith.constant 0 : index
    %c3_38 = arith.constant 3 : index
    %c0_39 = arith.constant 0 : index
    %c0_40 = arith.constant 0 : index
    %43 = vector.load %arg4[%c0_37, %c3_38, %c0_39, %c0_40] : memref<1x18x32x32xf32, #tpu.memory_space<vmem>>, vector<1x1x32x32xf32>
    %44 = vector.shape_cast %43 : vector<1x1x32x32xf32> to vector<32x32xf32>
    %cst_41 = arith.constant dense<0.000000e+00> : vector<32x128xf32>
    %45 = tpu.matmul %44, %42, %cst_41 {dimension_numbers = #tpu.dot_dimension_numbers<[1], [0], [0], [1], [0, 0, 1, 1], [], []>} : vector<32x32xf32>, vector<32x128xf32>, vector<32x128xf32> -> vector<32x128xf32>
    %46 = arith.addf %37, %45 : vector<32x128xf32>
    %c0_42 = arith.constant 0 : index
    %c4 = arith.constant 4 : index
    %c0_43 = arith.constant 0 : index
    %c0_44 = arith.constant 0 : index
    %47 = vector.load %arg4[%c0_42, %c4, %c0_43, %c0_44] : memref<1x18x32x32xf32, #tpu.memory_space<vmem>>, vector<1x1x32x32xf32>
    %48 = vector.shape_cast %47 : vector<1x1x32x32xf32> to vector<32x32xf32>
    %cst_45 = arith.constant dense<0.000000e+00> : vector<32x128xf32>
    %49 = tpu.matmul %48, %8, %cst_45 {dimension_numbers = #tpu.dot_dimension_numbers<[1], [0], [0], [1], [0, 0, 1, 1], [], []>} : vector<32x32xf32>, vector<32x128xf32>, vector<32x128xf32> -> vector<32x128xf32>
    %50 = arith.addf %46, %49 : vector<32x128xf32>
    %c127_i32 = arith.constant 127 : i32
    %51 = tpu.dynamic_rotate %8 by %c127_i32 dim 1 : vector<32x128xf32>, i32 -> vector<32x128xf32>
    %c5 = arith.constant 5 : index
    %c0_46 = arith.constant 0 : index
    %c0_47 = arith.constant 0 : index
    %52 = vector.load %arg2[%c5, %c0_46, %c0_47] : memref<9x1x128xf32, #tpu.memory_space<vmem>>, vector<1x1x128xf32>
    %53 = vector.shape_cast %52 : vector<1x1x128xf32> to vector<1x128xf32>
    %54 = vector.broadcast %53 : vector<1x128xf32> to vector<32x128xf32>
    %55 = arith.mulf %51, %54 : vector<32x128xf32>
    %c0_48 = arith.constant 0 : index
    %c5_49 = arith.constant 5 : index
    %c0_50 = arith.constant 0 : index
    %c0_51 = arith.constant 0 : index
    %56 = vector.load %arg4[%c0_48, %c5_49, %c0_50, %c0_51] : memref<1x18x32x32xf32, #tpu.memory_space<vmem>>, vector<1x1x32x32xf32>
    %57 = vector.shape_cast %56 : vector<1x1x32x32xf32> to vector<32x32xf32>
    %cst_52 = arith.constant dense<0.000000e+00> : vector<32x128xf32>
    %58 = tpu.matmul %57, %55, %cst_52 {dimension_numbers = #tpu.dot_dimension_numbers<[1], [0], [0], [1], [0, 0, 1, 1], [], []>} : vector<32x32xf32>, vector<32x128xf32>, vector<32x128xf32> -> vector<32x128xf32>
    %59 = arith.addf %50, %58 : vector<32x128xf32>
    %c126_i32 = arith.constant 126 : i32
    %60 = tpu.dynamic_rotate %8 by %c126_i32 dim 1 : vector<32x128xf32>, i32 -> vector<32x128xf32>
    %c6 = arith.constant 6 : index
    %c0_53 = arith.constant 0 : index
    %c0_54 = arith.constant 0 : index
    %61 = vector.load %arg2[%c6, %c0_53, %c0_54] : memref<9x1x128xf32, #tpu.memory_space<vmem>>, vector<1x1x128xf32>
    %62 = vector.shape_cast %61 : vector<1x1x128xf32> to vector<1x128xf32>
    %63 = vector.broadcast %62 : vector<1x128xf32> to vector<32x128xf32>
    %64 = arith.mulf %60, %63 : vector<32x128xf32>
    %c0_55 = arith.constant 0 : index
    %c6_56 = arith.constant 6 : index
    %c0_57 = arith.constant 0 : index
    %c0_58 = arith.constant 0 : index
    %65 = vector.load %arg4[%c0_55, %c6_56, %c0_57, %c0_58] : memref<1x18x32x32xf32, #tpu.memory_space<vmem>>, vector<1x1x32x32xf32>
    %66 = vector.shape_cast %65 : vector<1x1x32x32xf32> to vector<32x32xf32>
    %cst_59 = arith.constant dense<0.000000e+00> : vector<32x128xf32>
    %67 = tpu.matmul %66, %64, %cst_59 {dimension_numbers = #tpu.dot_dimension_numbers<[1], [0], [0], [1], [0, 0, 1, 1], [], []>} : vector<32x32xf32>, vector<32x128xf32>, vector<32x128xf32> -> vector<32x128xf32>
    %68 = arith.addf %59, %67 : vector<32x128xf32>
    %c125_i32 = arith.constant 125 : i32
    %69 = tpu.dynamic_rotate %8 by %c125_i32 dim 1 : vector<32x128xf32>, i32 -> vector<32x128xf32>
    %c7 = arith.constant 7 : index
    %c0_60 = arith.constant 0 : index
    %c0_61 = arith.constant 0 : index
    %70 = vector.load %arg2[%c7, %c0_60, %c0_61] : memref<9x1x128xf32, #tpu.memory_space<vmem>>, vector<1x1x128xf32>
    %71 = vector.shape_cast %70 : vector<1x1x128xf32> to vector<1x128xf32>
    %72 = vector.broadcast %71 : vector<1x128xf32> to vector<32x128xf32>
    %73 = arith.mulf %69, %72 : vector<32x128xf32>
    %c0_62 = arith.constant 0 : index
    %c7_63 = arith.constant 7 : index
    %c0_64 = arith.constant 0 : index
    %c0_65 = arith.constant 0 : index
    %74 = vector.load %arg4[%c0_62, %c7_63, %c0_64, %c0_65] : memref<1x18x32x32xf32, #tpu.memory_space<vmem>>, vector<1x1x32x32xf32>
    %75 = vector.shape_cast %74 : vector<1x1x32x32xf32> to vector<32x32xf32>
    %cst_66 = arith.constant dense<0.000000e+00> : vector<32x128xf32>
    %76 = tpu.matmul %75, %73, %cst_66 {dimension_numbers = #tpu.dot_dimension_numbers<[1], [0], [0], [1], [0, 0, 1, 1], [], []>} : vector<32x32xf32>, vector<32x128xf32>, vector<32x128xf32> -> vector<32x128xf32>
    %77 = arith.addf %68, %76 : vector<32x128xf32>
    %c124_i32 = arith.constant 124 : i32
    %78 = tpu.dynamic_rotate %8 by %c124_i32 dim 1 : vector<32x128xf32>, i32 -> vector<32x128xf32>
    %c8 = arith.constant 8 : index
    %c0_67 = arith.constant 0 : index
    %c0_68 = arith.constant 0 : index
    %79 = vector.load %arg2[%c8, %c0_67, %c0_68] : memref<9x1x128xf32, #tpu.memory_space<vmem>>, vector<1x1x128xf32>
    %80 = vector.shape_cast %79 : vector<1x1x128xf32> to vector<1x128xf32>
    %81 = vector.broadcast %80 : vector<1x128xf32> to vector<32x128xf32>
    %82 = arith.mulf %78, %81 : vector<32x128xf32>
    %c0_69 = arith.constant 0 : index
    %c8_70 = arith.constant 8 : index
    %c0_71 = arith.constant 0 : index
    %c0_72 = arith.constant 0 : index
    %83 = vector.load %arg4[%c0_69, %c8_70, %c0_71, %c0_72] : memref<1x18x32x32xf32, #tpu.memory_space<vmem>>, vector<1x1x32x32xf32>
    %84 = vector.shape_cast %83 : vector<1x1x32x32xf32> to vector<32x32xf32>
    %cst_73 = arith.constant dense<0.000000e+00> : vector<32x128xf32>
    %85 = tpu.matmul %84, %82, %cst_73 {dimension_numbers = #tpu.dot_dimension_numbers<[1], [0], [0], [1], [0, 0, 1, 1], [], []>} : vector<32x32xf32>, vector<32x128xf32>, vector<32x128xf32> -> vector<32x128xf32>
    %86 = arith.addf %77, %85 : vector<32x128xf32>
    %cst_74 = arith.constant 0.000000e+00 : f32
    %87 = vector.broadcast %cst_74 : f32 to vector<32x128xf32>
    %88 = arith.maximumf %86, %87 : vector<32x128xf32>
    %c0_75 = arith.constant 0 : index
    %c2_76 = arith.constant 2 : index
    %c0_77 = arith.constant 0 : index
    %c0_78 = arith.constant 0 : index
    %89 = vector.load %arg5[%c0_75, %c2_76, %c0_77, %c0_78] : memref<1x3x32x128xf32, #tpu.memory_space<vmem>>, vector<1x1x32x128xf32>
    %90 = vector.shape_cast %89 : vector<1x1x32x128xf32> to vector<32x128xf32>
    %c4_i32_79 = arith.constant 4 : i32
    %91 = tpu.dynamic_rotate %88 by %c4_i32_79 dim 1 : vector<32x128xf32>, i32 -> vector<32x128xf32>
    %c0_80 = arith.constant 0 : index
    %c0_81 = arith.constant 0 : index
    %c0_82 = arith.constant 0 : index
    %92 = vector.load %arg2[%c0_80, %c0_81, %c0_82] : memref<9x1x128xf32, #tpu.memory_space<vmem>>, vector<1x1x128xf32>
    %93 = vector.shape_cast %92 : vector<1x1x128xf32> to vector<1x128xf32>
    %94 = vector.broadcast %93 : vector<1x128xf32> to vector<32x128xf32>
    %95 = arith.mulf %91, %94 : vector<32x128xf32>
    %c0_83 = arith.constant 0 : index
    %c9 = arith.constant 9 : index
    %c0_84 = arith.constant 0 : index
    %c0_85 = arith.constant 0 : index
    %96 = vector.load %arg4[%c0_83, %c9, %c0_84, %c0_85] : memref<1x18x32x32xf32, #tpu.memory_space<vmem>>, vector<1x1x32x32xf32>
    %97 = vector.shape_cast %96 : vector<1x1x32x32xf32> to vector<32x32xf32>
    %cst_86 = arith.constant dense<0.000000e+00> : vector<32x128xf32>
    %98 = tpu.matmul %97, %95, %cst_86 {dimension_numbers = #tpu.dot_dimension_numbers<[1], [0], [0], [1], [0, 0, 1, 1], [], []>} : vector<32x32xf32>, vector<32x128xf32>, vector<32x128xf32> -> vector<32x128xf32>
    %99 = arith.addf %90, %98 : vector<32x128xf32>
    %c3_i32_87 = arith.constant 3 : i32
    %100 = tpu.dynamic_rotate %88 by %c3_i32_87 dim 1 : vector<32x128xf32>, i32 -> vector<32x128xf32>
    %c1_88 = arith.constant 1 : index
    %c0_89 = arith.constant 0 : index
    %c0_90 = arith.constant 0 : index
    %101 = vector.load %arg2[%c1_88, %c0_89, %c0_90] : memref<9x1x128xf32, #tpu.memory_space<vmem>>, vector<1x1x128xf32>
    %102 = vector.shape_cast %101 : vector<1x1x128xf32> to vector<1x128xf32>
    %103 = vector.broadcast %102 : vector<1x128xf32> to vector<32x128xf32>
    %104 = arith.mulf %100, %103 : vector<32x128xf32>
    %c0_91 = arith.constant 0 : index
    %c10 = arith.constant 10 : index
    %c0_92 = arith.constant 0 : index
    %c0_93 = arith.constant 0 : index
    %105 = vector.load %arg4[%c0_91, %c10, %c0_92, %c0_93] : memref<1x18x32x32xf32, #tpu.memory_space<vmem>>, vector<1x1x32x32xf32>
    %106 = vector.shape_cast %105 : vector<1x1x32x32xf32> to vector<32x32xf32>
    %cst_94 = arith.constant dense<0.000000e+00> : vector<32x128xf32>
    %107 = tpu.matmul %106, %104, %cst_94 {dimension_numbers = #tpu.dot_dimension_numbers<[1], [0], [0], [1], [0, 0, 1, 1], [], []>} : vector<32x32xf32>, vector<32x128xf32>, vector<32x128xf32> -> vector<32x128xf32>
    %108 = arith.addf %99, %107 : vector<32x128xf32>
    %c2_i32_95 = arith.constant 2 : i32
    %109 = tpu.dynamic_rotate %88 by %c2_i32_95 dim 1 : vector<32x128xf32>, i32 -> vector<32x128xf32>
    %c2_96 = arith.constant 2 : index
    %c0_97 = arith.constant 0 : index
    %c0_98 = arith.constant 0 : index
    %110 = vector.load %arg2[%c2_96, %c0_97, %c0_98] : memref<9x1x128xf32, #tpu.memory_space<vmem>>, vector<1x1x128xf32>
    %111 = vector.shape_cast %110 : vector<1x1x128xf32> to vector<1x128xf32>
    %112 = vector.broadcast %111 : vector<1x128xf32> to vector<32x128xf32>
    %113 = arith.mulf %109, %112 : vector<32x128xf32>
    %c0_99 = arith.constant 0 : index
    %c11 = arith.constant 11 : index
    %c0_100 = arith.constant 0 : index
    %c0_101 = arith.constant 0 : index
    %114 = vector.load %arg4[%c0_99, %c11, %c0_100, %c0_101] : memref<1x18x32x32xf32, #tpu.memory_space<vmem>>, vector<1x1x32x32xf32>
    %115 = vector.shape_cast %114 : vector<1x1x32x32xf32> to vector<32x32xf32>
    %cst_102 = arith.constant dense<0.000000e+00> : vector<32x128xf32>
    %116 = tpu.matmul %115, %113, %cst_102 {dimension_numbers = #tpu.dot_dimension_numbers<[1], [0], [0], [1], [0, 0, 1, 1], [], []>} : vector<32x32xf32>, vector<32x128xf32>, vector<32x128xf32> -> vector<32x128xf32>
    %117 = arith.addf %108, %116 : vector<32x128xf32>
    %c1_i32_103 = arith.constant 1 : i32
    %118 = tpu.dynamic_rotate %88 by %c1_i32_103 dim 1 : vector<32x128xf32>, i32 -> vector<32x128xf32>
    %c3_104 = arith.constant 3 : index
    %c0_105 = arith.constant 0 : index
    %c0_106 = arith.constant 0 : index
    %119 = vector.load %arg2[%c3_104, %c0_105, %c0_106] : memref<9x1x128xf32, #tpu.memory_space<vmem>>, vector<1x1x128xf32>
    %120 = vector.shape_cast %119 : vector<1x1x128xf32> to vector<1x128xf32>
    %121 = vector.broadcast %120 : vector<1x128xf32> to vector<32x128xf32>
    %122 = arith.mulf %118, %121 : vector<32x128xf32>
    %c0_107 = arith.constant 0 : index
    %c12 = arith.constant 12 : index
    %c0_108 = arith.constant 0 : index
    %c0_109 = arith.constant 0 : index
    %123 = vector.load %arg4[%c0_107, %c12, %c0_108, %c0_109] : memref<1x18x32x32xf32, #tpu.memory_space<vmem>>, vector<1x1x32x32xf32>
    %124 = vector.shape_cast %123 : vector<1x1x32x32xf32> to vector<32x32xf32>
    %cst_110 = arith.constant dense<0.000000e+00> : vector<32x128xf32>
    %125 = tpu.matmul %124, %122, %cst_110 {dimension_numbers = #tpu.dot_dimension_numbers<[1], [0], [0], [1], [0, 0, 1, 1], [], []>} : vector<32x32xf32>, vector<32x128xf32>, vector<32x128xf32> -> vector<32x128xf32>
    %126 = arith.addf %117, %125 : vector<32x128xf32>
    %c0_111 = arith.constant 0 : index
    %c13 = arith.constant 13 : index
    %c0_112 = arith.constant 0 : index
    %c0_113 = arith.constant 0 : index
    %127 = vector.load %arg4[%c0_111, %c13, %c0_112, %c0_113] : memref<1x18x32x32xf32, #tpu.memory_space<vmem>>, vector<1x1x32x32xf32>
    %128 = vector.shape_cast %127 : vector<1x1x32x32xf32> to vector<32x32xf32>
    %cst_114 = arith.constant dense<0.000000e+00> : vector<32x128xf32>
    %129 = tpu.matmul %128, %88, %cst_114 {dimension_numbers = #tpu.dot_dimension_numbers<[1], [0], [0], [1], [0, 0, 1, 1], [], []>} : vector<32x32xf32>, vector<32x128xf32>, vector<32x128xf32> -> vector<32x128xf32>
    %130 = arith.addf %126, %129 : vector<32x128xf32>
    %c127_i32_115 = arith.constant 127 : i32
    %131 = tpu.dynamic_rotate %88 by %c127_i32_115 dim 1 : vector<32x128xf32>, i32 -> vector<32x128xf32>
    %c5_116 = arith.constant 5 : index
    %c0_117 = arith.constant 0 : index
    %c0_118 = arith.constant 0 : index
    %132 = vector.load %arg2[%c5_116, %c0_117, %c0_118] : memref<9x1x128xf32, #tpu.memory_space<vmem>>, vector<1x1x128xf32>
    %133 = vector.shape_cast %132 : vector<1x1x128xf32> to vector<1x128xf32>
    %134 = vector.broadcast %133 : vector<1x128xf32> to vector<32x128xf32>
    %135 = arith.mulf %131, %134 : vector<32x128xf32>
    %c0_119 = arith.constant 0 : index
    %c14 = arith.constant 14 : index
    %c0_120 = arith.constant 0 : index
    %c0_121 = arith.constant 0 : index
    %136 = vector.load %arg4[%c0_119, %c14, %c0_120, %c0_121] : memref<1x18x32x32xf32, #tpu.memory_space<vmem>>, vector<1x1x32x32xf32>
    %137 = vector.shape_cast %136 : vector<1x1x32x32xf32> to vector<32x32xf32>
    %cst_122 = arith.constant dense<0.000000e+00> : vector<32x128xf32>
    %138 = tpu.matmul %137, %135, %cst_122 {dimension_numbers = #tpu.dot_dimension_numbers<[1], [0], [0], [1], [0, 0, 1, 1], [], []>} : vector<32x32xf32>, vector<32x128xf32>, vector<32x128xf32> -> vector<32x128xf32>
    %139 = arith.addf %130, %138 : vector<32x128xf32>
    %c126_i32_123 = arith.constant 126 : i32
    %140 = tpu.dynamic_rotate %88 by %c126_i32_123 dim 1 : vector<32x128xf32>, i32 -> vector<32x128xf32>
    %c6_124 = arith.constant 6 : index
    %c0_125 = arith.constant 0 : index
    %c0_126 = arith.constant 0 : index
    %141 = vector.load %arg2[%c6_124, %c0_125, %c0_126] : memref<9x1x128xf32, #tpu.memory_space<vmem>>, vector<1x1x128xf32>
    %142 = vector.shape_cast %141 : vector<1x1x128xf32> to vector<1x128xf32>
    %143 = vector.broadcast %142 : vector<1x128xf32> to vector<32x128xf32>
    %144 = arith.mulf %140, %143 : vector<32x128xf32>
    %c0_127 = arith.constant 0 : index
    %c15 = arith.constant 15 : index
    %c0_128 = arith.constant 0 : index
    %c0_129 = arith.constant 0 : index
    %145 = vector.load %arg4[%c0_127, %c15, %c0_128, %c0_129] : memref<1x18x32x32xf32, #tpu.memory_space<vmem>>, vector<1x1x32x32xf32>
    %146 = vector.shape_cast %145 : vector<1x1x32x32xf32> to vector<32x32xf32>
    %cst_130 = arith.constant dense<0.000000e+00> : vector<32x128xf32>
    %147 = tpu.matmul %146, %144, %cst_130 {dimension_numbers = #tpu.dot_dimension_numbers<[1], [0], [0], [1], [0, 0, 1, 1], [], []>} : vector<32x32xf32>, vector<32x128xf32>, vector<32x128xf32> -> vector<32x128xf32>
    %148 = arith.addf %139, %147 : vector<32x128xf32>
    %c125_i32_131 = arith.constant 125 : i32
    %149 = tpu.dynamic_rotate %88 by %c125_i32_131 dim 1 : vector<32x128xf32>, i32 -> vector<32x128xf32>
    %c7_132 = arith.constant 7 : index
    %c0_133 = arith.constant 0 : index
    %c0_134 = arith.constant 0 : index
    %150 = vector.load %arg2[%c7_132, %c0_133, %c0_134] : memref<9x1x128xf32, #tpu.memory_space<vmem>>, vector<1x1x128xf32>
    %151 = vector.shape_cast %150 : vector<1x1x128xf32> to vector<1x128xf32>
    %152 = vector.broadcast %151 : vector<1x128xf32> to vector<32x128xf32>
    %153 = arith.mulf %149, %152 : vector<32x128xf32>
    %c0_135 = arith.constant 0 : index
    %c16 = arith.constant 16 : index
    %c0_136 = arith.constant 0 : index
    %c0_137 = arith.constant 0 : index
    %154 = vector.load %arg4[%c0_135, %c16, %c0_136, %c0_137] : memref<1x18x32x32xf32, #tpu.memory_space<vmem>>, vector<1x1x32x32xf32>
    %155 = vector.shape_cast %154 : vector<1x1x32x32xf32> to vector<32x32xf32>
    %cst_138 = arith.constant dense<0.000000e+00> : vector<32x128xf32>
    %156 = tpu.matmul %155, %153, %cst_138 {dimension_numbers = #tpu.dot_dimension_numbers<[1], [0], [0], [1], [0, 0, 1, 1], [], []>} : vector<32x32xf32>, vector<32x128xf32>, vector<32x128xf32> -> vector<32x128xf32>
    %157 = arith.addf %148, %156 : vector<32x128xf32>
    %c124_i32_139 = arith.constant 124 : i32
    %158 = tpu.dynamic_rotate %88 by %c124_i32_139 dim 1 : vector<32x128xf32>, i32 -> vector<32x128xf32>
    %c8_140 = arith.constant 8 : index
    %c0_141 = arith.constant 0 : index
    %c0_142 = arith.constant 0 : index
    %159 = vector.load %arg2[%c8_140, %c0_141, %c0_142] : memref<9x1x128xf32, #tpu.memory_space<vmem>>, vector<1x1x128xf32>
    %160 = vector.shape_cast %159 : vector<1x1x128xf32> to vector<1x128xf32>
    %161 = vector.broadcast %160 : vector<1x128xf32> to vector<32x128xf32>
    %162 = arith.mulf %158, %161 : vector<32x128xf32>
    %c0_143 = arith.constant 0 : index
    %c17 = arith.constant 17 : index
    %c0_144 = arith.constant 0 : index
    %c0_145 = arith.constant 0 : index
    %163 = vector.load %arg4[%c0_143, %c17, %c0_144, %c0_145] : memref<1x18x32x32xf32, #tpu.memory_space<vmem>>, vector<1x1x32x32xf32>
    %164 = vector.shape_cast %163 : vector<1x1x32x32xf32> to vector<32x32xf32>
    %cst_146 = arith.constant dense<0.000000e+00> : vector<32x128xf32>
    %165 = tpu.matmul %164, %162, %cst_146 {dimension_numbers = #tpu.dot_dimension_numbers<[1], [0], [0], [1], [0, 0, 1, 1], [], []>} : vector<32x32xf32>, vector<32x128xf32>, vector<32x128xf32> -> vector<32x128xf32>
    %166 = arith.addf %157, %165 : vector<32x128xf32>
    %cst_147 = arith.constant 0.000000e+00 : f32
    %167 = vector.broadcast %cst_147 : f32 to vector<32x128xf32>
    %168 = arith.maximumf %166, %167 : vector<32x128xf32>
    %c0_148 = arith.constant 0 : index
    %c0_149 = arith.constant 0 : index
    %c0_150 = arith.constant 0 : index
    %169 = vector.load %arg6[%c0_148, %c0_149, %c0_150] : memref<1x32x128xf32, #tpu.memory_space<vmem>>, vector<1x32x128xf32>
    %170 = vector.shape_cast %169 : vector<1x32x128xf32> to vector<32x128xf32>
    %171 = vector.shape_cast %168 : vector<32x128xf32> to vector<1x32x128xf32>
    tpu.vector_store %arg6[%c0_148, %c0_149, %c0_150], %171 {strides = array<i32>} : memref<1x32x128xf32, #tpu.memory_space<vmem>>, vector<1x32x128xf32>,
    return
  }
  func.func @transform_0(%arg0: i32) -> (i32, i32) {
    %c0_i32 = arith.constant 0 : i32
    %c0_i32_0 = arith.constant 0 : i32
    %c0_i32_1 = arith.constant 0 : i32
    return %c0_i32, %c0_i32_0 : i32, i32
  }
  func.func @transform_1(%arg0: i32) -> (i32, i32, i32) {
    %c0_i32 = arith.constant 0 : i32
    %c0_i32_0 = arith.constant 0 : i32
    %c0_i32_1 = arith.constant 0 : i32
    %c0_i32_2 = arith.constant 0 : i32
    return %c0_i32, %c0_i32_0, %c0_i32_1 : i32, i32, i32
  }
  func.func @transform_2(%arg0: i32) -> (i32, i32, i32) {
    %c0_i32 = arith.constant 0 : i32
    %c0_i32_0 = arith.constant 0 : i32
    %c0_i32_1 = arith.constant 0 : i32
    return %arg0, %c0_i32, %c0_i32_0 : i32, i32, i32
  }
  func.func @transform_3(%arg0: i32) -> (i32, i32, i32, i32) {
    %c0_i32 = arith.constant 0 : i32
    %c0_i32_0 = arith.constant 0 : i32
    %c0_i32_1 = arith.constant 0 : i32
    %c0_i32_2 = arith.constant 0 : i32
    return %arg0, %c0_i32, %c0_i32_0, %c0_i32_1 : i32, i32, i32, i32
  }
  func.func @transform_4(%arg0: i32) -> (i32, i32, i32, i32) {
    %c0_i32 = arith.constant 0 : i32
    %c0_i32_0 = arith.constant 0 : i32
    %c0_i32_1 = arith.constant 0 : i32
    %c0_i32_2 = arith.constant 0 : i32
    return %arg0, %c0_i32, %c0_i32_0, %c0_i32_1 : i32, i32, i32, i32
  }
  func.func @transform_5(%arg0: i32) -> (i32, i32, i32) {
    %c0_i32 = arith.constant 0 : i32
    %c0_i32_0 = arith.constant 0 : i32
    %c0_i32_1 = arith.constant 0 : i32
    return %arg0, %c0_i32, %c0_i32_0 : i32, i32, i32
  }
}

</mosaic_0001>

<llo_original>
// kernel: forward.1
$region0: #{forward.1}
  #allocation0 [shape = 'u32[]', space=smem, size = 0x4, offset = 0x4, fixed_abs, tag = 'smem constant byte address 0x4 - core index']
  #allocation1 [shape = 'u32[144,128]{1,0:T(1,128)}', space=vmem, size = 0x12000, scoped, tag = 'internal scratch']
  %s0 = inlined_call_operand.vmem [shape: f32[72,128], index: 0, kind: input, shape index: {}]
  %s1 = inlined_call_operand.vmem [shape: f32[9,1,128], index: 1, kind: input, shape index: {}]
  %s2 = inlined_call_operand.vmem [shape: f32[2,32,72], index: 2, kind: input, shape index: {}]
  %s3 = inlined_call_operand.hbm [shape: f32[2,18,32,32], index: 3, kind: input, shape index: {}]
  %s4 = inlined_call_operand.vmem [shape: f32[2,3,32,128], index: 4, kind: input, shape index: {}]
  %s5 = inlined_call_operand.vmem [shape: f32[2,32,128], index: 5, kind: output, shape index: {}]
  %s6 = sld [smem:[#allocation0]]
  $region57: #{forward.1} parent=0
    _
  %s8 = ssub.s32 1, %s6
  %s9 = scalar_select 0, %s8, %s6
  $region1: #{forward.1} parent=0
    #allocation2 [shape = 'u8[589824]{0}', space=vmem, size = 0x90000, scoped, tag = 'input window, operand 3']
    #allocation3 [shape = 's32[2]{0}', space=sflag, size = 0x8, scoped, tag = 'scoped memory for forward.1']
    %10 = vsyncpa [#allocation3], 0
    %s11 = scalar_lea.sflag [#allocation3], 1
    %12 = vsyncpa %s11, 0
    loop: start=0, step=1, limit=4
    $region2: #{forward.1} parent=1 // loop_pre_header
      _
    $region3: #{forward.1} parent=1 // loop_header
      %s14 = sphi 0, %s18
      %p15 = scmp.ge.s32.totalorder %s14, 4
      %s22 = sphi 0, %s22
      %s24 = sphi 0, %s22
      %s25 = sphi 0, %s24
      %s39 = sphi 0, %s25
      %s43 = sphi 0, %s43
      %s45 = sphi 0, %s43
      %s46 = sphi 0, %s45
      %s60 = sphi 0, %s46
      %s66 = sphi 0, %s68
      %s69 = sphi 0, %s66
      %s70 = sphi 0, %s69
      %s86 = sphi 0, %s70
      %s92 = sphi 0, %s94
      %s95 = sphi 0, %s92
      %s96 = sphi 0, %s95
      %s112 = sphi 0, %s96
      %s118 = sphi 0, %s120
      %s121 = sphi 0, %s118
      %s122 = sphi 0, %s121
      %s138 = sphi 0, %s122
      %s144 = sphi 0, %s146
      %s147 = sphi 0, %s144
      %s148 = sphi 0, %s147
      %s164 = sphi 0, %s148
    $region4: #{forward.1} parent=1 // loop_header_branch
      %17 = sbr.rel (%p15) target = $region8
    $region5: #{forward.1} parent=1 // loop_body
      %s19 = ssub.s32 %s14, 1
      %s20 = ssub.s32 %s14, 2
      %s21 = sadd.s32 %s14, 1
      %s23 = sadd.s32 %s22, 1
      %p26 = scmp.eq.s32.totalorder %s14, 1
      %p27 = scmp.ne.s32.totalorder %s22, %s24
      %p28 = scmp.eq.s32.totalorder %s14, 0
      %p29 = por %p27, %p28
      %p30 = scmp.ne.s32.totalorder %s22, %s24
      %p31 = scmp.eq.s32.totalorder %s19, 1
      %p32 = por %p30, %p31
      %p33 = scmp.ne.s32.totalorder %s24, %s25
      %p34 = scmp.eq.s32.totalorder %s19, 0
      %p35 = por %p33, %p34
      %p36 = scmp.ne.s32.totalorder %s24, %s25
      %p37 = scmp.eq.s32.totalorder %s20, 1
      %p38 = por %p36, %p37
      %p40 = scmp.ne.s32.totalorder %s25, %s39
      %p41 = scmp.eq.s32.totalorder %s20, 0
      %p42 = por %p40, %p41
      %s44 = sadd.s32 %s43, 1
      %p47 = scmp.eq.s32.totalorder %s14, 1
      %p48 = scmp.ne.s32.totalorder %s43, %s45
      %p49 = scmp.eq.s32.totalorder %s14, 0
      %p50 = por %p48, %p49
      %p51 = scmp.ne.s32.totalorder %s43, %s45
      %p52 = scmp.eq.s32.totalorder %s19, 1
      %p53 = por %p51, %p52
      %p54 = scmp.ne.s32.totalorder %s45, %s46
      %p55 = scmp.eq.s32.totalorder %s19, 0
      %p56 = por %p54, %p55
      %p57 = scmp.ne.s32.totalorder %s45, %s46
      %p58 = scmp.eq.s32.totalorder %s20, 1
      %p59 = por %p57, %p58
      %p61 = scmp.ne.s32.totalorder %s46, %s60
      %p62 = scmp.eq.s32.totalorder %s20, 0
      %p63 = por %p61, %p62
      %s64 = ssub.s32 %s14, %s21
      %p65 = scmp.eq.s32.totalorder %s64, 0
      %s67 = sadd.s32 %s66, 1
      %s68 = scalar_select %p65, %s66, %s67
      %p71 = pneg %p65
      %p72 = scmp.eq.s32.totalorder %s14, 1
      %p73 = por %p71, %p72
      %p74 = scmp.ne.s32.totalorder %s66, %s69
      %p75 = scmp.eq.s32.totalorder %s14, 0
      %p76 = por %p74, %p75
      %p77 = scmp.ne.s32.totalorder %s66, %s69
      %p78 = scmp.eq.s32.totalorder %s19, 1
      %p79 = por %p77, %p78
      %p80 = scmp.ne.s32.totalorder %s69, %s70
      %p81 = scmp.eq.s32.totalorder %s19, 0
      %p82 = por %p80, %p81
      %p83 = scmp.ne.s32.totalorder %s69, %s70
      %p84 = scmp.eq.s32.totalorder %s20, 1
      %p85 = por %p83, %p84
      %p87 = scmp.ne.s32.totalorder %s70, %s86
      %p88 = scmp.eq.s32.totalorder %s20, 0
      %p89 = por %p87, %p88
      %s90 = ssub.s32 %s14, %s21
      %p91 = scmp.eq.s32.totalorder %s90, 0
      %s93 = sadd.s32 %s92, 1
      %s94 = scalar_select %p91, %s92, %s93
      %p97 = pneg %p91
      %p98 = scmp.eq.s32.totalorder %s14, 1
      %p99 = por %p97, %p98
      %p100 = scmp.ne.s32.totalorder %s92, %s95
      %p101 = scmp.eq.s32.totalorder %s14, 0
      %p102 = por %p100, %p101
      %p103 = scmp.ne.s32.totalorder %s92, %s95
      %p104 = scmp.eq.s32.totalorder %s19, 1
      %p105 = por %p103, %p104
      %p106 = scmp.ne.s32.totalorder %s95, %s96
      %p107 = scmp.eq.s32.totalorder %s19, 0
      %p108 = por %p106, %p107
      %p109 = scmp.ne.s32.totalorder %s95, %s96
      %p110 = scmp.eq.s32.totalorder %s20, 1
      %p111 = por %p109, %p110
      %p113 = scmp.ne.s32.totalorder %s96, %s112
      %p114 = scmp.eq.s32.totalorder %s20, 0
      %p115 = por %p113, %p114
      %s116 = ssub.s32 %s14, %s21
      %p117 = scmp.eq.s32.totalorder %s116, 0
      %s119 = sadd.s32 %s118, 1
      %s120 = scalar_select %p117, %s118, %s119
      %p123 = pneg %p117
      %p124 = scmp.eq.s32.totalorder %s14, 1
      %p125 = por %p123, %p124
      %p126 = scmp.ne.s32.totalorder %s118, %s121
      %p127 = scmp.eq.s32.totalorder %s14, 0
      %p128 = por %p126, %p127
      %p129 = scmp.ne.s32.totalorder %s118, %s121
      %p130 = scmp.eq.s32.totalorder %s19, 1
      %p131 = por %p129, %p130
      %p132 = scmp.ne.s32.totalorder %s121, %s122
      %p133 = scmp.eq.s32.totalorder %s19, 0
      %p134 = por %p132, %p133
      %p135 = scmp.ne.s32.totalorder %s121, %s122
      %p136 = scmp.eq.s32.totalorder %s20, 1
      %p137 = por %p135, %p136
      %p139 = scmp.ne.s32.totalorder %s122, %s138
      %p140 = scmp.eq.s32.totalorder %s20, 0
      %p141 = por %p139, %p140
      %s142 = ssub.s32 %s14, %s21
      %p143 = scmp.eq.s32.totalorder %s142, 0
      %s145 = sadd.s32 %s144, 1
      %s146 = scalar_select %p143, %s144, %s145
      %p149 = pneg %p143
      %p150 = scmp.eq.s32.totalorder %s14, 1
      %p151 = por %p149, %p150
      %p152 = scmp.ne.s32.totalorder %s144, %s147
      %p153 = scmp.eq.s32.totalorder %s14, 0
      %p154 = por %p152, %p153
      %p155 = scmp.ne.s32.totalorder %s144, %s147
      %p156 = scmp.eq.s32.totalorder %s19, 1
      %p157 = por %p155, %p156
      %p158 = scmp.ne.s32.totalorder %s147, %s148
      %p159 = scmp.eq.s32.totalorder %s19, 0
      %p160 = por %p158, %p159
      %p161 = scmp.ne.s32.totalorder %s147, %s148
      %p162 = scmp.eq.s32.totalorder %s20, 1
      %p163 = por %p161, %p162
      %p165 = scmp.ne.s32.totalorder %s148, %s164
      %p166 = scmp.eq.s32.totalorder %s20, 0
      %p167 = por %p165, %p166
      %p168 = scmp.le.s32.totalorder 1, %s14
      %p169 = scmp.lt.s32.totalorder %s14, 3
      %p170 = pnand %p168, %p169
      %p171 = pneg %p170
      // Predicated region
      $region9: #{forward.1} parent=5 // pred_check
        _
      $region10: #{forward.1} parent=5 // pred_check_branch
        %173 = sbr.rel (%p170) target = $region12
      $region11: #{forward.1} parent=5 // pred_region
        %s174 = ssub.s32 %s14, 1
        // Predicated region
        $region13: #{forward.1} parent=11 // pred_check
          %p175 = pneg %p35
        $region14: #{forward.1} parent=11 // pred_check_branch
          %177 = sbr.rel (%p175) target = $region16
        $region15: #{forward.1} parent=11 // pred_region
          _
        $region16: #{forward.1} parent=11 // pred_fallthru
          _
        // Predicated region
        $region17: #{forward.1} parent=11 // pred_check
          %p178 = pneg %p56
        $region18: #{forward.1} parent=11 // pred_check_branch
          %180 = sbr.rel (%p178) target = $region20
        $region19: #{forward.1} parent=11 // pred_region
          _
        $region20: #{forward.1} parent=11 // pred_fallthru
          _
      $region12: #{forward.1} parent=5 // pred_fallthru
        _
      %p181 = scmp.lt.s32.totalorder %s14, 2
      // Predicated region
      $region21: #{forward.1} parent=5 // pred_check
        %p182 = pneg %p181
      $region22: #{forward.1} parent=5 // pred_check_branch
        %184 = sbr.rel (%p182) target = $region24
      $region23: #{forward.1} parent=5 // pred_region
        // Predicated region
        $region25: #{forward.1} parent=23 // pred_check
          %p185 = pneg %p76
        $region26: #{forward.1} parent=23 // pred_check_branch
          %187 = sbr.rel (%p185) target = $region28
        $region27: #{forward.1} parent=23 // pred_region
          %p188 = scmp.lt.s32.totalorder %s14, 1
          %s189 = scalar_select %p188, %s14, 1
          %s190 = smul.addr %s189, 4
          %s191 = smul.addr %s190, 8
          %s192 = scalar_lea.vmem %s2, %s191
        $region28: #{forward.1} parent=23 // pred_fallthru
          _
        // Predicated region
        $region29: #{forward.1} parent=23 // pred_check
          %p193 = pneg %p102
        $region30: #{forward.1} parent=23 // pred_check_branch
          %195 = sbr.rel (%p193) target = $region32
        $region31: #{forward.1} parent=23 // pred_region
          %s196 = sand.u32 %s92, 1
          %s197 = scalar_lea.sflag [#allocation3], %s196
          %s198 = sand.u32 %s92, 1
          %s199 = smul.addr %s198, 576
          %s200 = scalar_lea.vmem [#allocation2], %s199
          %s202 = ssub.s32 9216, 9216
          %203 = vsyncadd %s197, %s202
          %s204 = smul.addr %s14, 72
          %s205 = smul.addr %s204, 128
          %s206 = scalar_lea.hbm %s3, %s205
          %s207 = sshll.u32 %s200, 4
          %s208 = int_to_ptr.vmem [resolvable:$true] %s207
          %213 = dma.hbm_to_vmem [thread:$0]  %s206, 9216, %s208, %s197, 128, 128, 8
        $region32: #{forward.1} parent=23 // pred_fallthru
          _
        // Predicated region
        $region33: #{forward.1} parent=23 // pred_check
          %p214 = pneg %p128
        $region34: #{forward.1} parent=23 // pred_check_branch
          %216 = sbr.rel (%p214) target = $region36
        $region35: #{forward.1} parent=23 // pred_region
          %p217 = scmp.lt.s32.totalorder %s14, 1
          %s218 = scalar_select %p217, %s14, 1
          %s219 = smul.addr %s218, 12
          %s220 = smul.addr %s219, 8
          %s221 = scalar_lea.vmem %s4, %s220
        $region36: #{forward.1} parent=23 // pred_fallthru
          _
      $region24: #{forward.1} parent=5 // pred_fallthru
        _
      %p222 = scmp.le.s32.totalorder 1, %s14
      %p223 = scmp.lt.s32.totalorder %s14, 3
      %p224 = pnand %p222, %p223
      %p225 = pneg %p224
      // Predicated region
      $region37: #{forward.1} parent=5 // pred_check
        _
      $region38: #{forward.1} parent=5 // pred_check_branch
        %227 = sbr.rel (%p224) target = $region40
      $region39: #{forward.1} parent=5 // pred_region
        %s228 = ssub.s32 %s14, 1
        %s229 = sand.u32 %s95, 1
        %s230 = scalar_lea.sflag [#allocation3], %s229
        %s231 = sand.u32 %s95, 1
        %s232 = smul.addr %s231, 576
        %s233 = scalar_lea.vmem [#allocation2], %s232
        // Predicated region
        $region41: #{forward.1} parent=39 // pred_check
          %p234 = pneg %p108
        $region42: #{forward.1} parent=39 // pred_check_branch
          %236 = sbr.rel (%p234) target = $region44
        $region43: #{forward.1} parent=39 // pred_region
          %237 = dma.done %s230, 9216
        $region44: #{forward.1} parent=39 // pred_fallthru
          _
        %p238 = pneg %p35
        %p239 = pneg %p32
        %p240 = pneg %p56
        %p241 = pneg %p53
        %p242 = scmp.lt.s32.totalorder %s19, 1
        %s243 = scalar_select %p242, %s19, 1
        %s244 = smul.addr %s243, 4
        %s245 = smul.addr %s244, 8
        %s246 = scalar_lea.vmem %s2, %s245
        %p247 = pneg %p82
        %p248 = pneg %p79
        %s249 = sand.u32 %s95, 1
        %s250 = scalar_lea.sflag [#allocation3], %s249
        %s251 = sand.u32 %s95, 1
        %s252 = smul.addr %s251, 576
        %s253 = scalar_lea.vmem [#allocation2], %s252
        %p254 = pneg %p108
        %p255 = pneg %p105
        %p256 = scmp.lt.s32.totalorder %s19, 1
        %s257 = scalar_select %p256, %s19, 1
        %s258 = smul.addr %s257, 12
        %s259 = smul.addr %s258, 8
        %s260 = scalar_lea.vmem %s4, %s259
        %p261 = pneg %p134
        %p262 = pneg %p131
        %p263 = pneg %p160
        %p264 = pneg %p157
        %p265 = scmp.lt.s32.totalorder %s19, 1
        %s266 = scalar_select %p265, %s19, 1
        %s267 = smul.addr %s266, 4
        %s268 = smul.addr %s267, 8
        %s269 = scalar_lea.vmem %s5, %s268
        %p270 = scmp.lt.s32.totalorder %s19, 1
        %s271 = scalar_select %p270, %s19, 1
        %s272 = smul.addr %s271, 4
        %s273 = smul.addr %s272, 8
        %s274 = scalar_lea.vmem %s2, %s273
        %p275 = scmp.lt.s32.totalorder %s19, 1
        %s276 = scalar_select %p275, %s19, 1
        %s277 = smul.addr %s276, 12
        %s278 = smul.addr %s277, 8
        %s279 = scalar_lea.vmem %s4, %s278
        %p280 = scmp.lt.s32.totalorder %s19, 1
        %s281 = scalar_select %p280, %s19, 1
        %s282 = smul.addr %s281, 4
        %s283 = smul.addr %s282, 8
        %s284 = scalar_lea.vmem %s5, %s283
        %v285 = vld [vmem:[%s274] sm:$0xff]
        %v286 = vld [vmem:[%s274 + $0x8] sm:$0xff]
        %v287 = vld [vmem:[%s274 + $0x10] sm:$0xff]
        %v288 = vld [vmem:[%s274 + $0x18] sm:$0xff]
        %v289 = vld [vmem:[%s0] sm:$0xff]
        %v290 = vld [vmem:[%s0 + $0x8] sm:$0xff]
        %v291 = vld [vmem:[%s0 + $0x10] sm:$0xff]
        %v292 = vld [vmem:[%s0 + $0x18] sm:$0xff]
        %v293 = vld [vmem:[%s0 + $0x20] sm:$0xff]
        %v294 = vld [vmem:[%s0 + $0x28] sm:$0xff]
        %v295 = vld [vmem:[%s0 + $0x30] sm:$0xff]
        %v296 = vld [vmem:[%s0 + $0x38] sm:$0xff]
        %v297 = vld [vmem:[%s0 + $0x40] sm:$0xff]
        %v298 = vld [vmem:[%s279] sm:$0xff]
        %v299 = vld [vmem:[%s279 + $0x8] sm:$0xff]
        %v300 = vld [vmem:[%s279 + $0x10] sm:$0xff]
        %v301 = vld [vmem:[%s279 + $0x18] sm:$0xff]
        %vm302 = vcmask 588800
        %v304 = vsel %vm302, %v285, 0
        %v307 = vsel %vm302, %v286, 0
        %v310 = vsel %vm302, %v287, 0
        %v313 = vsel %vm302, %v288, 0
        %315 = vmatprep.subr.mxu0 0.0
        %316 = vmatpush1.msra.mxu0 0.0
        %317 = vmatprep.subr.mxu0 0.0
        %318 = vmatpush1.msra.mxu0 0.0
        %319 = vmatprep.subr.mxu0 0.0
        %320 = vmatpush1.msra.mxu0 0.0
        %321 = vmatprep.subr.mxu0 0.0
        %322 = vmatpush1.msra.mxu0 0.0
        %323 = vmatprep.subr.mxu0 0.0
        %324 = vmatpush1.msra.mxu0 0.0
        %325 = vmatprep.subr.mxu0 0.0
        %326 = vmatpush1.msra.mxu0 0.0
        %327 = vmatprep.subr.mxu0 0.0
        %328 = vmatpush1.msra.mxu0 0.0
        %329 = vmatprep.subr.mxu0 0.0
        %330 = vmatpush1.msra.mxu0 %v297
        %331 = vmatprep.subr.mxu0 0.0
        %332 = vmatpush1.msra.mxu0 %v296
        %333 = vmatprep.subr.mxu0 0.0
        %334 = vmatpush1.msra.mxu0 %v295
        %335 = vmatprep.subr.mxu0 0.0
        %336 = vmatpush1.msra.mxu0 %v294
        %337 = vmatprep.subr.mxu0 0.0
        %338 = vmatpush1.msra.mxu0 %v293
        %339 = vmatprep.subr.mxu0 0.0
        %340 = vmatpush1.msra.mxu0 %v292
        %341 = vmatprep.subr.mxu0 0.0
        %342 = vmatpush1.msra.mxu0 %v291
        %343 = vmatprep.subr.mxu0 0.0
        %344 = vmatpush1.msra.mxu0 %v290
        %345 = vmatprep.subr.mxu0 0.0
        %346 = vmatpush1.msra.mxu0 %v289
        %347 = vmatprep.subr.mxu0 0.0
        %348 = vmatpush2.msra.mxu0 0.0
        %349 = vmatprep.subr.mxu0 0.0
        %350 = vmatpush2.msra.mxu0 0.0
        %351 = vmatprep.subr.mxu0 0.0
        %352 = vmatpush2.msra.mxu0 0.0
        %353 = vmatprep.subr.mxu0 0.0
        %354 = vmatpush2.msra.mxu0 0.0
        %355 = vmatprep.subr.mxu0 0.0
        %356 = vmatpush2.msra.mxu0 0.0
        %357 = vmatprep.subr.mxu0 0.0
        %358 = vmatpush2.msra.mxu0 0.0
        %359 = vmatprep.subr.mxu0 0.0
        %360 = vmatpush2.msra.mxu0 0.0
        %361 = vmatprep.subr.mxu0 0.0
        %362 = vmatpush2.msra.mxu0 0.0
        %363 = vmatprep.subr.mxu0 0.0
        %364 = vmatpush2.msra.mxu0 0.0
        %365 = vmatprep.subr.mxu0 0.0
        %366 = vmatpush2.msra.mxu0 0.0
        %367 = vmatprep.subr.mxu0 0.0
        %368 = vmatpush2.msra.mxu0 0.0
        %369 = vmatprep.subr.mxu0 0.0
        %370 = vmatpush2.msra.mxu0 0.0
        %371 = vmatprep.subr.mxu0 0.0
        %372 = vmatpush2.msra.mxu0 0.0
        %373 = vmatprep.subr.mxu0 0.0
        %374 = vmatpush2.msra.mxu0 0.0
        %375 = vmatprep.subr.mxu0 0.0
        %376 = vmatpush2.msra.mxu0 0.0
        %377 = vmatprep.subr.mxu0 0.0
        %378 = vmatpush2.msra.mxu0 0.0
        %379 = vmatprep.mubr.f32.mxu0 0.0
        %380 = vmatmul.mubr.f32.gmra.mxu0 %v304
        %v381 = vpop.f32.mrf.mxu0
        %v382 = vadd.f32 %v298, %v381
        %v383 = vpop.f32.mrf.mxu0
        %384 = vmatprep.mubr.f32.mxu0 0.0
        %385 = vmatmul.mubr.f32.gmra.mxu0 %v307
        %v386 = vpop.f32.mrf.mxu0
        %v387 = vadd.f32 %v299, %v386
        %v388 = vpop.f32.mrf.mxu0
        %389 = vmatprep.mubr.f32.mxu0 0.0
        %390 = vmatmul.mubr.f32.gmra.mxu0 %v310
        %v391 = vpop.f32.mrf.mxu0
        %v392 = vadd.f32 %v300, %v391
        %v393 = vpop.f32.mrf.mxu0
        %394 = vmatprep.mubr.f32.mxu0 0.0
        %395 = vmatmul.mubr.f32.gmra.mxu0 %v313
        %v396 = vpop.f32.mrf.mxu0
        %v397 = vadd.f32 %v301, %v396
        %v398 = vpop.f32.mrf.mxu0
        %399 = vdwg.mxu0
        %v400 = vmax.f32 %v382, 0.0
        %v401 = vmax.f32 %v387, 0.0
        %v402 = vmax.f32 %v392, 0.0
        %v403 = vmax.f32 %v397, 0.0
        %s404 = scalar_lea.vmem %s279, 32
        %v405 = vld [vmem:[%s404] sm:$0xff]
        %v406 = vld [vmem:[%s404 + $0x8] sm:$0xff]
        %v407 = vld [vmem:[%s404 + $0x10] sm:$0xff]
        %v408 = vld [vmem:[%s404 + $0x18] sm:$0xff]
        %409 = vrot.lane.b32.xlu0 %v400, 4
        %v410 = vpop.permute.xlu0 %409
        %411 = vrot.lane.b32.xlu0 %v401, 4
        %v412 = vpop.permute.xlu0 %411
        %413 = vrot.lane.b32.xlu0 %v402, 4
        %v414 = vpop.permute.xlu0 %413
        %415 = vrot.lane.b32.xlu0 %v403, 4
        %v416 = vpop.permute.xlu0 %415
        %v417 = vld [vmem:[%s1] sm:$0x1]
        %v419 = vlaneseq
        %v420 = vshrl.u32 %v419, 7
        %v421 = vsub.s32 0, %v420
        %v422 = vrot.slane %v417, %v421
        %v424 = vmul.f32 %v410, %v422
        %v425 = vmul.f32 %v412, %v422
        %v426 = vmul.f32 %v414, %v422
        %v427 = vmul.f32 %v416, %v422
        %v428 = vld [vmem:[%s233] sm:$0xff]
        %v429 = vld [vmem:[%s233 + $0x8] sm:$0xff]
        %v430 = vld [vmem:[%s233 + $0x10] sm:$0xff]
        %v431 = vld [vmem:[%s233 + $0x18] sm:$0xff]
        %vm432 = vcmask 261120
        %v434 = vsel %vm432, %v428, 0
        %v437 = vsel %vm432, %v429, 0
        %v440 = vsel %vm432, %v430, 0
        %v443 = vsel %vm432, %v431, 0
        %445 = vmatprep.subr.mxu0 0.0
        %446 = vmatpush1.msra.mxu0 0.0
        %447 = vmatprep.subr.mxu0 0.0
        %448 = vmatpush1.msra.mxu0 0.0
        %449 = vmatprep.subr.mxu0 0.0
        %450 = vmatpush1.msra.mxu0 0.0
        %451 = vmatprep.subr.mxu0 0.0
        %452 = vmatpush1.msra.mxu0 0.0
        %453 = vmatprep.subr.mxu0 0.0
        %454 = vmatpush1.msra.mxu0 0.0
        %455 = vmatprep.subr.mxu0 0.0
        %456 = vmatpush1.msra.mxu0 0.0
        %457 = vmatprep.subr.mxu0 0.0
        %458 = vmatpush1.msra.mxu0 0.0
        %459 = vmatprep.subr.mxu0 0.0
        %460 = vmatpush1.msra.mxu0 0.0
        %461 = vmatprep.subr.mxu0 0.0
        %462 = vmatpush1.msra.mxu0 0.0
        %463 = vmatprep.subr.mxu0 0.0
        %464 = vmatpush1.msra.mxu0 0.0
        %465 = vmatprep.subr.mxu0 0.0
        %466 = vmatpush1.msra.mxu0 0.0
        %467 = vmatprep.subr.mxu0 0.0
        %468 = vmatpush1.msra.mxu0 0.0
        %469 = vmatprep.subr.mxu0 0.0
        %470 = vmatpush1.msra.mxu0 %v427
        %471 = vmatprep.subr.mxu0 0.0
        %472 = vmatpush1.msra.mxu0 %v426
        %473 = vmatprep.subr.mxu0 0.0
        %474 = vmatpush1.msra.mxu0 %v425
        %475 = vmatprep.subr.mxu0 0.0
        %476 = vmatpush1.msra.mxu0 %v424
        %477 = vmatprep.subr.mxu0 0.0
        %478 = vmatpush2.msra.mxu0 0.0
        %479 = vmatprep.subr.mxu0 0.0
        %480 = vmatpush2.msra.mxu0 0.0
        %481 = vmatprep.subr.mxu0 0.0
        %482 = vmatpush2.msra.mxu0 0.0
        %483 = vmatprep.subr.mxu0 0.0
        %484 = vmatpush2.msra.mxu0 0.0
        %485 = vmatprep.subr.mxu0 0.0
        %486 = vmatpush2.msra.mxu0 0.0
        %487 = vmatprep.subr.mxu0 0.0
        %488 = vmatpush2.msra.mxu0 0.0
        %489 = vmatprep.subr.mxu0 0.0
        %490 = vmatpush2.msra.mxu0 0.0
        %491 = vmatprep.subr.mxu0 0.0
        %492 = vmatpush2.msra.mxu0 0.0
        %493 = vmatprep.subr.mxu0 0.0
        %494 = vmatpush2.msra.mxu0 0.0
        %495 = vmatprep.subr.mxu0 0.0
        %496 = vmatpush2.msra.mxu0 0.0
        %497 = vmatprep.subr.mxu0 0.0
        %498 = vmatpush2.msra.mxu0 0.0
        %499 = vmatprep.subr.mxu0 0.0
        %500 = vmatpush2.msra.mxu0 0.0
        %501 = vmatprep.subr.mxu0 0.0
        %502 = vmatpush2.msra.mxu0 0.0
        %503 = vmatprep.subr.mxu0 0.0
        %504 = vmatpush2.msra.mxu0 0.0
        %505 = vmatprep.subr.mxu0 0.0
        %506 = vmatpush2.msra.mxu0 0.0
        %507 = vmatprep.subr.mxu0 0.0
        %508 = vmatpush2.msra.mxu0 0.0
        %509 = vmatprep.mubr.f32.mxu0 0.0
        %510 = vmatmul.mubr.f32.gmra.mxu0 %v434
        %v511 = vpop.f32.mrf.mxu0
        %v512 = vadd.f32 0.0, %v511
        %v513 = vpop.f32.mrf.mxu0
        %514 = vmatprep.mubr.f32.mxu0 0.0
        %515 = vmatmul.mubr.f32.gmra.mxu0 %v437
        %v516 = vpop.f32.mrf.mxu0
        %v517 = vadd.f32 0.0, %v516
        %v518 = vpop.f32.mrf.mxu0
        %519 = vmatprep.mubr.f32.mxu0 0.0
        %520 = vmatmul.mubr.f32.gmra.mxu0 %v440
        %v521 = vpop.f32.mrf.mxu0
        %v522 = vadd.f32 0.0, %v521
        %v523 = vpop.f32.mrf.mxu0
        %524 = vmatprep.mubr.f32.mxu0 0.0
        %525 = vmatmul.mubr.f32.gmra.mxu0 %v443
        %v526 = vpop.f32.mrf.mxu0
        %v527 = vadd.f32 0.0, %v526
        %v528 = vpop.f32.mrf.mxu0
        %529 = vdwg.mxu0
        %v530 = vadd.f32 %v405, %v512
        %v531 = vadd.f32 %v406, %v517
        %v532 = vadd.f32 %v407, %v522
        %v533 = vadd.f32 %v408, %v527
        %534 = vrot.lane.b32.xlu0 %v400, 3
        %v535 = vpop.permute.xlu0 %534
        %536 = vrot.lane.b32.xlu0 %v401, 3
        %v537 = vpop.permute.xlu0 %536
        %538 = vrot.lane.b32.xlu0 %v402, 3
        %v539 = vpop.permute.xlu0 %538
        %540 = vrot.lane.b32.xlu0 %v403, 3
        %v541 = vpop.permute.xlu0 %540
        %s542 = scalar_lea.vmem %s1, 1
        %v543 = vld [vmem:[%s542] sm:$0x1]
        %v545 = vlaneseq
        %v546 = vshrl.u32 %v545, 7
        %v547 = vsub.s32 0, %v546
        %v548 = vrot.slane %v543, %v547
        %v550 = vmul.f32 %v535, %v548
        %v551 = vmul.f32 %v537, %v548
        %v552 = vmul.f32 %v539, %v548
        %v553 = vmul.f32 %v541, %v548
        %s554 = scalar_lea.vmem %s233, 32 [#allocation2]
        %v555 = vld [vmem:[%s554] sm:$0xff]
        %v556 = vld [vmem:[%s554 + $0x8] sm:$0xff]
        %v557 = vld [vmem:[%s554 + $0x10] sm:$0xff]
        %v558 = vld [vmem:[%s554 + $0x18] sm:$0xff]
        %v560 = vsel %vm432, %v555, 0
        %v563 = vsel %vm432, %v556, 0
        %v566 = vsel %vm432, %v557, 0
        %v569 = vsel %vm432, %v558, 0
        %571 = vmatprep.subr.mxu0 0.0
        %572 = vmatpush1.msra.mxu0 0.0
        %573 = vmatprep.subr.mxu0 0.0
        %574 = vmatpush1.msra.mxu0 0.0
        %575 = vmatprep.subr.mxu0 0.0
        %576 = vmatpush1.msra.mxu0 0.0
        %577 = vmatprep.subr.mxu0 0.0
        %578 = vmatpush1.msra.mxu0 0.0
        %579 = vmatprep.subr.mxu0 0.0
        %580 = vmatpush1.msra.mxu0 0.0
        %581 = vmatprep.subr.mxu0 0.0
        %582 = vmatpush1.msra.mxu0 0.0
        %583 = vmatprep.subr.mxu0 0.0
        %584 = vmatpush1.msra.mxu0 0.0
        %585 = vmatprep.subr.mxu0 0.0
        %586 = vmatpush1.msra.mxu0 0.0
        %587 = vmatprep.subr.mxu0 0.0
        %588 = vmatpush1.msra.mxu0 0.0
        %589 = vmatprep.subr.mxu0 0.0
        %590 = vmatpush1.msra.mxu0 0.0
        %591 = vmatprep.subr.mxu0 0.0
        %592 = vmatpush1.msra.mxu0 0.0
        %593 = vmatprep.subr.mxu0 0.0
        %594 = vmatpush1.msra.mxu0 0.0
        %595 = vmatprep.subr.mxu0 0.0
        %596 = vmatpush1.msra.mxu0 %v553
        %597 = vmatprep.subr.mxu0 0.0
        %598 = vmatpush1.msra.mxu0 %v552
        %599 = vmatprep.subr.mxu0 0.0
        %600 = vmatpush1.msra.mxu0 %v551
        %601 = vmatprep.subr.mxu0 0.0
        %602 = vmatpush1.msra.mxu0 %v550
        %603 = vmatprep.subr.mxu0 0.0
        %604 = vmatpush2.msra.mxu0 0.0
        %605 = vmatprep.subr.mxu0 0.0
        %606 = vmatpush2.msra.mxu0 0.0
        %607 = vmatprep.subr.mxu0 0.0
        %608 = vmatpush2.msra.mxu0 0.0
        %609 = vmatprep.subr.mxu0 0.0
        %610 = vmatpush2.msra.mxu0 0.0
        %611 = vmatprep.subr.mxu0 0.0
        %612 = vmatpush2.msra.mxu0 0.0
        %613 = vmatprep.subr.mxu0 0.0
        %614 = vmatpush2.msra.mxu0 0.0
        %615 = vmatprep.subr.mxu0 0.0
        %616 = vmatpush2.msra.mxu0 0.0
        %617 = vmatprep.subr.mxu0 0.0
        %618 = vmatpush2.msra.mxu0 0.0
        %619 = vmatprep.subr.mxu0 0.0
        %620 = vmatpush2.msra.mxu0 0.0
        %621 = vmatprep.subr.mxu0 0.0
        %622 = vmatpush2.msra.mxu0 0.0
        %623 = vmatprep.subr.mxu0 0.0
        %624 = vmatpush2.msra.mxu0 0.0
        %625 = vmatprep.subr.mxu0 0.0
        %626 = vmatpush2.msra.mxu0 0.0
        %627 = vmatprep.subr.mxu0 0.0
        %628 = vmatpush2.msra.mxu0 0.0
        %629 = vmatprep.subr.mxu0 0.0
        %630 = vmatpush2.msra.mxu0 0.0
        %631 = vmatprep.subr.mxu0 0.0
        %632 = vmatpush2.msra.mxu0 0.0
        %633 = vmatprep.subr.mxu0 0.0
        %634 = vmatpush2.msra.mxu0 0.0
        %635 = vmatprep.mubr.f32.mxu0 0.0
        %636 = vmatmul.mubr.f32.gmra.mxu0 %v560
        %v637 = vpop.f32.mrf.mxu0
        %v638 = vadd.f32 0.0, %v637
        %v639 = vpop.f32.mrf.mxu0
        %640 = vmatprep.mubr.f32.mxu0 0.0
        %641 = vmatmul.mubr.f32.gmra.mxu0 %v563
        %v642 = vpop.f32.mrf.mxu0
        %v643 = vadd.f32 0.0, %v642
        %v644 = vpop.f32.mrf.mxu0
        %645 = vmatprep.mubr.f32.mxu0 0.0
        %646 = vmatmul.mubr.f32.gmra.mxu0 %v566
        %v647 = vpop.f32.mrf.mxu0
        %v648 = vadd.f32 0.0, %v647
        %v649 = vpop.f32.mrf.mxu0
        %650 = vmatprep.mubr.f32.mxu0 0.0
        %651 = vmatmul.mubr.f32.gmra.mxu0 %v569
        %v652 = vpop.f32.mrf.mxu0
        %v653 = vadd.f32 0.0, %v652
        %v654 = vpop.f32.mrf.mxu0
        %655 = vdwg.mxu0
        %v656 = vadd.f32 %v530, %v638
        %v657 = vadd.f32 %v531, %v643
        %v658 = vadd.f32 %v532, %v648
        %v659 = vadd.f32 %v533, %v653
        %660 = vrot.lane.b32.xlu0 %v400, 2
        %v661 = vpop.permute.xlu0 %660
        %662 = vrot.lane.b32.xlu0 %v401, 2
        %v663 = vpop.permute.xlu0 %662
        %664 = vrot.lane.b32.xlu0 %v402, 2
        %v665 = vpop.permute.xlu0 %664
        %666 = vrot.lane.b32.xlu0 %v403, 2
        %v667 = vpop.permute.xlu0 %666
        %s668 = scalar_lea.vmem %s1, 2
        %v669 = vld [vmem:[%s668] sm:$0x1]
        %v671 = vlaneseq
        %v672 = vshrl.u32 %v671, 7
        %v673 = vsub.s32 0, %v672
        %v674 = vrot.slane %v669, %v673
        %v676 = vmul.f32 %v661, %v674
        %v677 = vmul.f32 %v663, %v674
        %v678 = vmul.f32 %v665, %v674
        %v679 = vmul.f32 %v667, %v674
        %s680 = scalar_lea.vmem %s233, 64 [#allocation2]
        %v681 = vld [vmem:[%s680] sm:$0xff]
        %v682 = vld [vmem:[%s680 + $0x8] sm:$0xff]
        %v683 = vld [vmem:[%s680 + $0x10] sm:$0xff]
        %v684 = vld [vmem:[%s680 + $0x18] sm:$0xff]
        %v686 = vsel %vm432, %v681, 0
        %v689 = vsel %vm432, %v682, 0
        %v692 = vsel %vm432, %v683, 0
        %v695 = vsel %vm432, %v684, 0
        %697 = vmatprep.subr.mxu0 0.0
        %698 = vmatpush1.msra.mxu0 0.0
        %699 = vmatprep.subr.mxu0 0.0
        %700 = vmatpush1.msra.mxu0 0.0
        %701 = vmatprep.subr.mxu0 0.0
        %702 = vmatpush1.msra.mxu0 0.0
        %703 = vmatprep.subr.mxu0 0.0
        %704 = vmatpush1.msra.mxu0 0.0
        %705 = vmatprep.subr.mxu0 0.0
        %706 = vmatpush1.msra.mxu0 0.0
        %707 = vmatprep.subr.mxu0 0.0
        %708 = vmatpush1.msra.mxu0 0.0
        %709 = vmatprep.subr.mxu0 0.0
        %710 = vmatpush1.msra.mxu0 0.0
        %711 = vmatprep.subr.mxu0 0.0
        %712 = vmatpush1.msra.mxu0 0.0
        %713 = vmatprep.subr.mxu0 0.0
        %714 = vmatpush1.msra.mxu0 0.0
        %715 = vmatprep.subr.mxu0 0.0
        %716 = vmatpush1.msra.mxu0 0.0
        %717 = vmatprep.subr.mxu0 0.0
        %718 = vmatpush1.msra.mxu0 0.0
        %719 = vmatprep.subr.mxu0 0.0
        %720 = vmatpush1.msra.mxu0 0.0
        %721 = vmatprep.subr.mxu0 0.0
        %722 = vmatpush1.msra.mxu0 %v679
        %723 = vmatprep.subr.mxu0 0.0
        %724 = vmatpush1.msra.mxu0 %v678
        %725 = vmatprep.subr.mxu0 0.0
        %726 = vmatpush1.msra.mxu0 %v677
        %727 = vmatprep.subr.mxu0 0.0
        %728 = vmatpush1.msra.mxu0 %v676
        %729 = vmatprep.subr.mxu0 0.0
        %730 = vmatpush2.msra.mxu0 0.0
        %731 = vmatprep.subr.mxu0 0.0
        %732 = vmatpush2.msra.mxu0 0.0
        %733 = vmatprep.subr.mxu0 0.0
        %734 = vmatpush2.msra.mxu0 0.0
        %735 = vmatprep.subr.mxu0 0.0
        %736 = vmatpush2.msra.mxu0 0.0
        %737 = vmatprep.subr.mxu0 0.0
        %738 = vmatpush2.msra.mxu0 0.0
        %739 = vmatprep.subr.mxu0 0.0
        %740 = vmatpush2.msra.mxu0 0.0
        %741 = vmatprep.subr.mxu0 0.0
        %742 = vmatpush2.msra.mxu0 0.0
        %743 = vmatprep.subr.mxu0 0.0
        %744 = vmatpush2.msra.mxu0 0.0
        %745 = vmatprep.subr.mxu0 0.0
        %746 = vmatpush2.msra.mxu0 0.0
        %747 = vmatprep.subr.mxu0 0.0
        %748 = vmatpush2.msra.mxu0 0.0
        %749 = vmatprep.subr.mxu0 0.0
        %750 = vmatpush2.msra.mxu0 0.0
        %751 = vmatprep.subr.mxu0 0.0
        %752 = vmatpush2.msra.mxu0 0.0
        %753 = vmatprep.subr.mxu0 0.0
        %754 = vmatpush2.msra.mxu0 0.0
        %755 = vmatprep.subr.mxu0 0.0
        %756 = vmatpush2.msra.mxu0 0.0
        %757 = vmatprep.subr.mxu0 0.0
        %758 = vmatpush2.msra.mxu0 0.0
        %759 = vmatprep.subr.mxu0 0.0
        %760 = vmatpush2.msra.mxu0 0.0
        %761 = vmatprep.mubr.f32.mxu0 0.0
        %762 = vmatmul.mubr.f32.gmra.mxu0 %v686
        %v763 = vpop.f32.mrf.mxu0
        %v764 = vadd.f32 0.0, %v763
        %v765 = vpop.f32.mrf.mxu0
        %766 = vmatprep.mubr.f32.mxu0 0.0
        %767 = vmatmul.mubr.f32.gmra.mxu0 %v689
        %v768 = vpop.f32.mrf.mxu0
        %v769 = vadd.f32 0.0, %v768
        %v770 = vpop.f32.mrf.mxu0
        %771 = vmatprep.mubr.f32.mxu0 0.0
        %772 = vmatmul.mubr.f32.gmra.mxu0 %v692
        %v773 = vpop.f32.mrf.mxu0
        %v774 = vadd.f32 0.0, %v773
        %v775 = vpop.f32.mrf.mxu0
        %776 = vmatprep.mubr.f32.mxu0 0.0
        %777 = vmatmul.mubr.f32.gmra.mxu0 %v695
        %v778 = vpop.f32.mrf.mxu0
        %v779 = vadd.f32 0.0, %v778
        %v780 = vpop.f32.mrf.mxu0
        %781 = vdwg.mxu0
        %v782 = vadd.f32 %v656, %v764
        %v783 = vadd.f32 %v657, %v769
        %v784 = vadd.f32 %v658, %v774
        %v785 = vadd.f32 %v659, %v779
        %786 = vrot.lane.b32.xlu0 %v400, 1
        %v787 = vpop.permute.xlu0 %786
        %788 = vrot.lane.b32.xlu0 %v401, 1
        %v789 = vpop.permute.xlu0 %788
        %790 = vrot.lane.b32.xlu0 %v402, 1
        %v791 = vpop.permute.xlu0 %790
        %792 = vrot.lane.b32.xlu0 %v403, 1
        %v793 = vpop.permute.xlu0 %792
        %s794 = scalar_lea.vmem %s1, 3
        %v795 = vld [vmem:[%s794] sm:$0x1]
        %v797 = vlaneseq
        %v798 = vshrl.u32 %v797, 7
        %v799 = vsub.s32 0, %v798
        %v800 = vrot.slane %v795, %v799
        %v802 = vmul.f32 %v787, %v800
        %v803 = vmul.f32 %v789, %v800
        %v804 = vmul.f32 %v791, %v800
        %v805 = vmul.f32 %v793, %v800
        %s806 = scalar_lea.vmem %s233, 96 [#allocation2]
        %v807 = vld [vmem:[%s806] sm:$0xff]
        %v808 = vld [vmem:[%s806 + $0x8] sm:$0xff]
        %v809 = vld [vmem:[%s806 + $0x10] sm:$0xff]
        %v810 = vld [vmem:[%s806 + $0x18] sm:$0xff]
        %v812 = vsel %vm432, %v807, 0
        %v815 = vsel %vm432, %v808, 0
        %v818 = vsel %vm432, %v809, 0
        %v821 = vsel %vm432, %v810, 0
        %823 = vmatprep.subr.mxu0 0.0
        %824 = vmatpush1.msra.mxu0 0.0
        %825 = vmatprep.subr.mxu0 0.0
        %826 = vmatpush1.msra.mxu0 0.0
        %827 = vmatprep.subr.mxu0 0.0
        %828 = vmatpush1.msra.mxu0 0.0
        %829 = vmatprep.subr.mxu0 0.0
        %830 = vmatpush1.msra.mxu0 0.0
        %831 = vmatprep.subr.mxu0 0.0
        %832 = vmatpush1.msra.mxu0 0.0
        %833 = vmatprep.subr.mxu0 0.0
        %834 = vmatpush1.msra.mxu0 0.0
        %835 = vmatprep.subr.mxu0 0.0
        %836 = vmatpush1.msra.mxu0 0.0
        %837 = vmatprep.subr.mxu0 0.0
        %838 = vmatpush1.msra.mxu0 0.0
        %839 = vmatprep.subr.mxu0 0.0
        %840 = vmatpush1.msra.mxu0 0.0
        %841 = vmatprep.subr.mxu0 0.0
        %842 = vmatpush1.msra.mxu0 0.0
        %843 = vmatprep.subr.mxu0 0.0
        %844 = vmatpush1.msra.mxu0 0.0
        %845 = vmatprep.subr.mxu0 0.0
        %846 = vmatpush1.msra.mxu0 0.0
        %847 = vmatprep.subr.mxu0 0.0
        %848 = vmatpush1.msra.mxu0 %v805
        %849 = vmatprep.subr.mxu0 0.0
        %850 = vmatpush1.msra.mxu0 %v804
        %851 = vmatprep.subr.mxu0 0.0
        %852 = vmatpush1.msra.mxu0 %v803
        %853 = vmatprep.subr.mxu0 0.0
        %854 = vmatpush1.msra.mxu0 %v802
        %855 = vmatprep.subr.mxu0 0.0
        %856 = vmatpush2.msra.mxu0 0.0
        %857 = vmatprep.subr.mxu0 0.0
        %858 = vmatpush2.msra.mxu0 0.0
        %859 = vmatprep.subr.mxu0 0.0
        %860 = vmatpush2.msra.mxu0 0.0
        %861 = vmatprep.subr.mxu0 0.0
        %862 = vmatpush2.msra.mxu0 0.0
        %863 = vmatprep.subr.mxu0 0.0
        %864 = vmatpush2.msra.mxu0 0.0
        %865 = vmatprep.subr.mxu0 0.0
        %866 = vmatpush2.msra.mxu0 0.0
        %867 = vmatprep.subr.mxu0 0.0
        %868 = vmatpush2.msra.mxu0 0.0
        %869 = vmatprep.subr.mxu0 0.0
        %870 = vmatpush2.msra.mxu0 0.0
        %871 = vmatprep.subr.mxu0 0.0
        %872 = vmatpush2.msra.mxu0 0.0
        %873 = vmatprep.subr.mxu0 0.0
        %874 = vmatpush2.msra.mxu0 0.0
        %875 = vmatprep.subr.mxu0 0.0
        %876 = vmatpush2.msra.mxu0 0.0
        %877 = vmatprep.subr.mxu0 0.0
        %878 = vmatpush2.msra.mxu0 0.0
        %879 = vmatprep.subr.mxu0 0.0
        %880 = vmatpush2.msra.mxu0 0.0
        %881 = vmatprep.subr.mxu0 0.0
        %882 = vmatpush2.msra.mxu0 0.0
        %883 = vmatprep.subr.mxu0 0.0
        %884 = vmatpush2.msra.mxu0 0.0
        %885 = vmatprep.subr.mxu0 0.0
        %886 = vmatpush2.msra.mxu0 0.0
        %887 = vmatprep.mubr.f32.mxu0 0.0
        %888 = vmatmul.mubr.f32.gmra.mxu0 %v812
        %v889 = vpop.f32.mrf.mxu0
        %v890 = vadd.f32 0.0, %v889
        %v891 = vpop.f32.mrf.mxu0
        %892 = vmatprep.mubr.f32.mxu0 0.0
        %893 = vmatmul.mubr.f32.gmra.mxu0 %v815
        %v894 = vpop.f32.mrf.mxu0
        %v895 = vadd.f32 0.0, %v894
        %v896 = vpop.f32.mrf.mxu0
        %897 = vmatprep.mubr.f32.mxu0 0.0
        %898 = vmatmul.mubr.f32.gmra.mxu0 %v818
        %v899 = vpop.f32.mrf.mxu0
        %v900 = vadd.f32 0.0, %v899
        %v901 = vpop.f32.mrf.mxu0
        %902 = vmatprep.mubr.f32.mxu0 0.0
        %903 = vmatmul.mubr.f32.gmra.mxu0 %v821
        %v904 = vpop.f32.mrf.mxu0
        %v905 = vadd.f32 0.0, %v904
        %v906 = vpop.f32.mrf.mxu0
        %907 = vdwg.mxu0
        %v908 = vadd.f32 %v782, %v890
        %v909 = vadd.f32 %v783, %v895
        %v910 = vadd.f32 %v784, %v900
        %v911 = vadd.f32 %v785, %v905
        %s912 = scalar_lea.vmem %s233, 128 [#allocation2]
        %v913 = vld [vmem:[%s912] sm:$0xff]
        %v914 = vld [vmem:[%s912 + $0x8] sm:$0xff]
        %v915 = vld [vmem:[%s912 + $0x10] sm:$0xff]
        %v916 = vld [vmem:[%s912 + $0x18] sm:$0xff]
        %v918 = vsel %vm432, %v913, 0
        %v921 = vsel %vm432, %v914, 0
        %v924 = vsel %vm432, %v915, 0
        %v927 = vsel %vm432, %v916, 0
        %929 = vmatprep.subr.mxu0 0.0
        %930 = vmatpush1.msra.mxu0 0.0
        %931 = vmatprep.subr.mxu0 0.0
        %932 = vmatpush1.msra.mxu0 0.0
        %933 = vmatprep.subr.mxu0 0.0
        %934 = vmatpush1.msra.mxu0 0.0
        %935 = vmatprep.subr.mxu0 0.0
        %936 = vmatpush1.msra.mxu0 0.0
        %937 = vmatprep.subr.mxu0 0.0
        %938 = vmatpush1.msra.mxu0 0.0
        %939 = vmatprep.subr.mxu0 0.0
        %940 = vmatpush1.msra.mxu0 0.0
        %941 = vmatprep.subr.mxu0 0.0
        %942 = vmatpush1.msra.mxu0 0.0
        %943 = vmatprep.subr.mxu0 0.0
        %944 = vmatpush1.msra.mxu0 0.0
        %945 = vmatprep.subr.mxu0 0.0
        %946 = vmatpush1.msra.mxu0 0.0
        %947 = vmatprep.subr.mxu0 0.0
        %948 = vmatpush1.msra.mxu0 0.0
        %949 = vmatprep.subr.mxu0 0.0
        %950 = vmatpush1.msra.mxu0 0.0
        %951 = vmatprep.subr.mxu0 0.0
        %952 = vmatpush1.msra.mxu0 0.0
        %953 = vmatprep.subr.mxu0 0.0
        %954 = vmatpush1.msra.mxu0 %v403
        %955 = vmatprep.subr.mxu0 0.0
        %956 = vmatpush1.msra.mxu0 %v402
        %957 = vmatprep.subr.mxu0 0.0
        %958 = vmatpush1.msra.mxu0 %v401
        %959 = vmatprep.subr.mxu0 0.0
        %960 = vmatpush1.msra.mxu0 %v400
        %961 = vmatprep.subr.mxu0 0.0
        %962 = vmatpush2.msra.mxu0 0.0
        %963 = vmatprep.subr.mxu0 0.0
        %964 = vmatpush2.msra.mxu0 0.0
        %965 = vmatprep.subr.mxu0 0.0
        %966 = vmatpush2.msra.mxu0 0.0
        %967 = vmatprep.subr.mxu0 0.0
        %968 = vmatpush2.msra.mxu0 0.0
        %969 = vmatprep.subr.mxu0 0.0
        %970 = vmatpush2.msra.mxu0 0.0
        %971 = vmatprep.subr.mxu0 0.0
        %972 = vmatpush2.msra.mxu0 0.0
        %973 = vmatprep.subr.mxu0 0.0
        %974 = vmatpush2.msra.mxu0 0.0
        %975 = vmatprep.subr.mxu0 0.0
        %976 = vmatpush2.msra.mxu0 0.0
        %977 = vmatprep.subr.mxu0 0.0
        %978 = vmatpush2.msra.mxu0 0.0
        %979 = vmatprep.subr.mxu0 0.0
        %980 = vmatpush2.msra.mxu0 0.0
        %981 = vmatprep.subr.mxu0 0.0
        %982 = vmatpush2.msra.mxu0 0.0
        %983 = vmatprep.subr.mxu0 0.0
        %984 = vmatpush2.msra.mxu0 0.0
        %985 = vmatprep.subr.mxu0 0.0
        %986 = vmatpush2.msra.mxu0 0.0
        %987 = vmatprep.subr.mxu0 0.0
        %988 = vmatpush2.msra.mxu0 0.0
        %989 = vmatprep.subr.mxu0 0.0
        %990 = vmatpush2.msra.mxu0 0.0
        %991 = vmatprep.subr.mxu0 0.0
        %992 = vmatpush2.msra.mxu0 0.0
        %993 = vmatprep.mubr.f32.mxu0 0.0
        %994 = vmatmul.mubr.f32.gmra.mxu0 %v918
        %v995 = vpop.f32.mrf.mxu0
        %v996 = vadd.f32 0.0, %v995
        %v997 = vpop.f32.mrf.mxu0
        %998 = vmatprep.mubr.f32.mxu0 0.0
        %999 = vmatmul.mubr.f32.gmra.mxu0 %v921
        %v1000 = vpop.f32.mrf.mxu0
        %v1001 = vadd.f32 0.0, %v1000
        %v1002 = vpop.f32.mrf.mxu0
        %1003 = vmatprep.mubr.f32.mxu0 0.0
        %1004 = vmatmul.mubr.f32.gmra.mxu0 %v924
        %v1005 = vpop.f32.mrf.mxu0
        %v1006 = vadd.f32 0.0, %v1005
        %v1007 = vpop.f32.mrf.mxu0
        %1008 = vmatprep.mubr.f32.mxu0 0.0
        %1009 = vmatmul.mubr.f32.gmra.mxu0 %v927
        %v1010 = vpop.f32.mrf.mxu0
        %v1011 = vadd.f32 0.0, %v1010
        %v1012 = vpop.f32.mrf.mxu0
        %1013 = vdwg.mxu0
        %v1014 = vadd.f32 %v908, %v996
        %v1015 = vadd.f32 %v909, %v1001
        %v1016 = vadd.f32 %v910, %v1006
        %v1017 = vadd.f32 %v911, %v1011
        %1018 = vrot.lane.b32.xlu0 %v400, 127
        %v1019 = vpop.permute.xlu0 %1018
        %1020 = vrot.lane.b32.xlu0 %v401, 127
        %v1021 = vpop.permute.xlu0 %1020
        %1022 = vrot.lane.b32.xlu0 %v402, 127
        %v1023 = vpop.permute.xlu0 %1022
        %1024 = vrot.lane.b32.xlu0 %v403, 127
        %v1025 = vpop.permute.xlu0 %1024
        %s1026 = scalar_lea.vmem %s1, 5
        %v1027 = vld [vmem:[%s1026] sm:$0x1]
        %v1029 = vlaneseq
        %v1030 = vshrl.u32 %v1029, 7
        %v1031 = vsub.s32 0, %v1030
        %v1032 = vrot.slane %v1027, %v1031
        %v1034 = vmul.f32 %v1019, %v1032
        %v1035 = vmul.f32 %v1021, %v1032
        %v1036 = vmul.f32 %v1023, %v1032
        %v1037 = vmul.f32 %v1025, %v1032
        %s1038 = scalar_lea.vmem %s233, 160 [#allocation2]
        %v1039 = vld [vmem:[%s1038] sm:$0xff]
        %v1040 = vld [vmem:[%s1038 + $0x8] sm:$0xff]
        %v1041 = vld [vmem:[%s1038 + $0x10] sm:$0xff]
        %v1042 = vld [vmem:[%s1038 + $0x18] sm:$0xff]
        %v1044 = vsel %vm432, %v1039, 0
        %v1047 = vsel %vm432, %v1040, 0
        %v1050 = vsel %vm432, %v1041, 0
        %v1053 = vsel %vm432, %v1042, 0
        %1055 = vmatprep.subr.mxu0 0.0
        %1056 = vmatpush1.msra.mxu0 0.0
        %1057 = vmatprep.subr.mxu0 0.0
        %1058 = vmatpush1.msra.mxu0 0.0
        %1059 = vmatprep.subr.mxu0 0.0
        %1060 = vmatpush1.msra.mxu0 0.0
        %1061 = vmatprep.subr.mxu0 0.0
        %1062 = vmatpush1.msra.mxu0 0.0
        %1063 = vmatprep.subr.mxu0 0.0
        %1064 = vmatpush1.msra.mxu0 0.0
        %1065 = vmatprep.subr.mxu0 0.0
        %1066 = vmatpush1.msra.mxu0 0.0
        %1067 = vmatprep.subr.mxu0 0.0
        %1068 = vmatpush1.msra.mxu0 0.0
        %1069 = vmatprep.subr.mxu0 0.0
        %1070 = vmatpush1.msra.mxu0 0.0
        %1071 = vmatprep.subr.mxu0 0.0
        %1072 = vmatpush1.msra.mxu0 0.0
        %1073 = vmatprep.subr.mxu0 0.0
        %1074 = vmatpush1.msra.mxu0 0.0
        %1075 = vmatprep.subr.mxu0 0.0
        %1076 = vmatpush1.msra.mxu0 0.0
        %1077 = vmatprep.subr.mxu0 0.0
        %1078 = vmatpush1.msra.mxu0 0.0
        %1079 = vmatprep.subr.mxu0 0.0
        %1080 = vmatpush1.msra.mxu0 %v1037
        %1081 = vmatprep.subr.mxu0 0.0
        %1082 = vmatpush1.msra.mxu0 %v1036
        %1083 = vmatprep.subr.mxu0 0.0
        %1084 = vmatpush1.msra.mxu0 %v1035
        %1085 = vmatprep.subr.mxu0 0.0
        %1086 = vmatpush1.msra.mxu0 %v1034
        %1087 = vmatprep.subr.mxu0 0.0
        %1088 = vmatpush2.msra.mxu0 0.0
        %1089 = vmatprep.subr.mxu0 0.0
        %1090 = vmatpush2.msra.mxu0 0.0
        %1091 = vmatprep.subr.mxu0 0.0
        %1092 = vmatpush2.msra.mxu0 0.0
        %1093 = vmatprep.subr.mxu0 0.0
        %1094 = vmatpush2.msra.mxu0 0.0
        %1095 = vmatprep.subr.mxu0 0.0
        %1096 = vmatpush2.msra.mxu0 0.0
        %1097 = vmatprep.subr.mxu0 0.0
        %1098 = vmatpush2.msra.mxu0 0.0
        %1099 = vmatprep.subr.mxu0 0.0
        %1100 = vmatpush2.msra.mxu0 0.0
        %1101 = vmatprep.subr.mxu0 0.0
        %1102 = vmatpush2.msra.mxu0 0.0
        %1103 = vmatprep.subr.mxu0 0.0
        %1104 = vmatpush2.msra.mxu0 0.0
        %1105 = vmatprep.subr.mxu0 0.0
        %1106 = vmatpush2.msra.mxu0 0.0
        %1107 = vmatprep.subr.mxu0 0.0
        %1108 = vmatpush2.msra.mxu0 0.0
        %1109 = vmatprep.subr.mxu0 0.0
        %1110 = vmatpush2.msra.mxu0 0.0
        %1111 = vmatprep.subr.mxu0 0.0
        %1112 = vmatpush2.msra.mxu0 0.0
        %1113 = vmatprep.subr.mxu0 0.0
        %1114 = vmatpush2.msra.mxu0 0.0
        %1115 = vmatprep.subr.mxu0 0.0
        %1116 = vmatpush2.msra.mxu0 0.0
        %1117 = vmatprep.subr.mxu0 0.0
        %1118 = vmatpush2.msra.mxu0 0.0
        %1119 = vmatprep.mubr.f32.mxu0 0.0
        %1120 = vmatmul.mubr.f32.gmra.mxu0 %v1044
        %v1121 = vpop.f32.mrf.mxu0
        %v1122 = vadd.f32 0.0, %v1121
        %v1123 = vpop.f32.mrf.mxu0
        %1124 = vmatprep.mubr.f32.mxu0 0.0
        %1125 = vmatmul.mubr.f32.gmra.mxu0 %v1047
        %v1126 = vpop.f32.mrf.mxu0
        %v1127 = vadd.f32 0.0, %v1126
        %v1128 = vpop.f32.mrf.mxu0
        %1129 = vmatprep.mubr.f32.mxu0 0.0
        %1130 = vmatmul.mubr.f32.gmra.mxu0 %v1050
        %v1131 = vpop.f32.mrf.mxu0
        %v1132 = vadd.f32 0.0, %v1131
        %v1133 = vpop.f32.mrf.mxu0
        %1134 = vmatprep.mubr.f32.mxu0 0.0
        %1135 = vmatmul.mubr.f32.gmra.mxu0 %v1053
        %v1136 = vpop.f32.mrf.mxu0
        %v1137 = vadd.f32 0.0, %v1136
        %v1138 = vpop.f32.mrf.mxu0
        %1139 = vdwg.mxu0
        %v1140 = vadd.f32 %v1014, %v1122
        %v1141 = vadd.f32 %v1015, %v1127
        %v1142 = vadd.f32 %v1016, %v1132
        %v1143 = vadd.f32 %v1017, %v1137
        %1144 = vrot.lane.b32.xlu0 %v400, 126
        %v1145 = vpop.permute.xlu0 %1144
        %1146 = vrot.lane.b32.xlu0 %v401, 126
        %v1147 = vpop.permute.xlu0 %1146
        %1148 = vrot.lane.b32.xlu0 %v402, 126
        %v1149 = vpop.permute.xlu0 %1148
        %1150 = vrot.lane.b32.xlu0 %v403, 126
        %v1151 = vpop.permute.xlu0 %1150
        %s1152 = scalar_lea.vmem %s1, 6
        %v1153 = vld [vmem:[%s1152] sm:$0x1]
        %v1155 = vlaneseq
        %v1156 = vshrl.u32 %v1155, 7
        %v1157 = vsub.s32 0, %v1156
        %v1158 = vrot.slane %v1153, %v1157
        %v1160 = vmul.f32 %v1145, %v1158
        %v1161 = vmul.f32 %v1147, %v1158
        %v1162 = vmul.f32 %v1149, %v1158
        %v1163 = vmul.f32 %v1151, %v1158
        %s1164 = scalar_lea.vmem %s233, 192 [#allocation2]
        %v1165 = vld [vmem:[%s1164] sm:$0xff]
        %v1166 = vld [vmem:[%s1164 + $0x8] sm:$0xff]
        %v1167 = vld [vmem:[%s1164 + $0x10] sm:$0xff]
        %v1168 = vld [vmem:[%s1164 + $0x18] sm:$0xff]
        %v1170 = vsel %vm432, %v1165, 0
        %v1173 = vsel %vm432, %v1166, 0
        %v1176 = vsel %vm432, %v1167, 0
        %v1179 = vsel %vm432, %v1168, 0
        %1181 = vmatprep.subr.mxu0 0.0
        %1182 = vmatpush1.msra.mxu0 0.0
        %1183 = vmatprep.subr.mxu0 0.0
        %1184 = vmatpush1.msra.mxu0 0.0
        %1185 = vmatprep.subr.mxu0 0.0
        %1186 = vmatpush1.msra.mxu0 0.0
        %1187 = vmatprep.subr.mxu0 0.0
        %1188 = vmatpush1.msra.mxu0 0.0
        %1189 = vmatprep.subr.mxu0 0.0
        %1190 = vmatpush1.msra.mxu0 0.0
        %1191 = vmatprep.subr.mxu0 0.0
        %1192 = vmatpush1.msra.mxu0 0.0
        %1193 = vmatprep.subr.mxu0 0.0
        %1194 = vmatpush1.msra.mxu0 0.0
        %1195 = vmatprep.subr.mxu0 0.0
        %1196 = vmatpush1.msra.mxu0 0.0
        %1197 = vmatprep.subr.mxu0 0.0
        %1198 = vmatpush1.msra.mxu0 0.0
        %1199 = vmatprep.subr.mxu0 0.0
        %1200 = vmatpush1.msra.mxu0 0.0
        %1201 = vmatprep.subr.mxu0 0.0
        %1202 = vmatpush1.msra.mxu0 0.0
        %1203 = vmatprep.subr.mxu0 0.0
        %1204 = vmatpush1.msra.mxu0 0.0
        %1205 = vmatprep.subr.mxu0 0.0
        %1206 = vmatpush1.msra.mxu0 %v1163
        %1207 = vmatprep.subr.mxu0 0.0
        %1208 = vmatpush1.msra.mxu0 %v1162
        %1209 = vmatprep.subr.mxu0 0.0
        %1210 = vmatpush1.msra.mxu0 %v1161
        %1211 = vmatprep.subr.mxu0 0.0
        %1212 = vmatpush1.msra.mxu0 %v1160
        %1213 = vmatprep.subr.mxu0 0.0
        %1214 = vmatpush2.msra.mxu0 0.0
        %1215 = vmatprep.subr.mxu0 0.0
        %1216 = vmatpush2.msra.mxu0 0.0
        %1217 = vmatprep.subr.mxu0 0.0
        %1218 = vmatpush2.msra.mxu0 0.0
        %1219 = vmatprep.subr.mxu0 0.0
        %1220 = vmatpush2.msra.mxu0 0.0
        %1221 = vmatprep.subr.mxu0 0.0
        %1222 = vmatpush2.msra.mxu0 0.0
        %1223 = vmatprep.subr.mxu0 0.0
        %1224 = vmatpush2.msra.mxu0 0.0
        %1225 = vmatprep.subr.mxu0 0.0
        %1226 = vmatpush2.msra.mxu0 0.0
        %1227 = vmatprep.subr.mxu0 0.0
        %1228 = vmatpush2.msra.mxu0 0.0
        %1229 = vmatprep.subr.mxu0 0.0
        %1230 = vmatpush2.msra.mxu0 0.0
        %1231 = vmatprep.subr.mxu0 0.0
        %1232 = vmatpush2.msra.mxu0 0.0
        %1233 = vmatprep.subr.mxu0 0.0
        %1234 = vmatpush2.msra.mxu0 0.0
        %1235 = vmatprep.subr.mxu0 0.0
        %1236 = vmatpush2.msra.mxu0 0.0
        %1237 = vmatprep.subr.mxu0 0.0
        %1238 = vmatpush2.msra.mxu0 0.0
        %1239 = vmatprep.subr.mxu0 0.0
        %1240 = vmatpush2.msra.mxu0 0.0
        %1241 = vmatprep.subr.mxu0 0.0
        %1242 = vmatpush2.msra.mxu0 0.0
        %1243 = vmatprep.subr.mxu0 0.0
        %1244 = vmatpush2.msra.mxu0 0.0
        %1245 = vmatprep.mubr.f32.mxu0 0.0
        %1246 = vmatmul.mubr.f32.gmra.mxu0 %v1170
        %v1247 = vpop.f32.mrf.mxu0
        %v1248 = vadd.f32 0.0, %v1247
        %v1249 = vpop.f32.mrf.mxu0
        %1250 = vmatprep.mubr.f32.mxu0 0.0
        %1251 = vmatmul.mubr.f32.gmra.mxu0 %v1173
        %v1252 = vpop.f32.mrf.mxu0
        %v1253 = vadd.f32 0.0, %v1252
        %v1254 = vpop.f32.mrf.mxu0
        %1255 = vmatprep.mubr.f32.mxu0 0.0
        %1256 = vmatmul.mubr.f32.gmra.mxu0 %v1176
        %v1257 = vpop.f32.mrf.mxu0
        %v1258 = vadd.f32 0.0, %v1257
        %v1259 = vpop.f32.mrf.mxu0
        %1260 = vmatprep.mubr.f32.mxu0 0.0
        %1261 = vmatmul.mubr.f32.gmra.mxu0 %v1179
        %v1262 = vpop.f32.mrf.mxu0
        %v1263 = vadd.f32 0.0, %v1262
        %v1264 = vpop.f32.mrf.mxu0
        %1265 = vdwg.mxu0
        %v1266 = vadd.f32 %v1140, %v1248
        %v1267 = vadd.f32 %v1141, %v1253
        %v1268 = vadd.f32 %v1142, %v1258
        %v1269 = vadd.f32 %v1143, %v1263
        %1270 = vrot.lane.b32.xlu0 %v400, 125
        %v1271 = vpop.permute.xlu0 %1270
        %1272 = vrot.lane.b32.xlu0 %v401, 125
        %v1273 = vpop.permute.xlu0 %1272
        %1274 = vrot.lane.b32.xlu0 %v402, 125
        %v1275 = vpop.permute.xlu0 %1274
        %1276 = vrot.lane.b32.xlu0 %v403, 125
        %v1277 = vpop.permute.xlu0 %1276
        %s1278 = scalar_lea.vmem %s1, 7
        %v1279 = vld [vmem:[%s1278] sm:$0x1]
        %v1281 = vlaneseq
        %v1282 = vshrl.u32 %v1281, 7
        %v1283 = vsub.s32 0, %v1282
        %v1284 = vrot.slane %v1279, %v1283
        %v1286 = vmul.f32 %v1271, %v1284
        %v1287 = vmul.f32 %v1273, %v1284
        %v1288 = vmul.f32 %v1275, %v1284
        %v1289 = vmul.f32 %v1277, %v1284
        %s1290 = scalar_lea.vmem %s233, 224 [#allocation2]
        %v1291 = vld [vmem:[%s1290] sm:$0xff]
        %v1292 = vld [vmem:[%s1290 + $0x8] sm:$0xff]
        %v1293 = vld [vmem:[%s1290 + $0x10] sm:$0xff]
        %v1294 = vld [vmem:[%s1290 + $0x18] sm:$0xff]
        %v1296 = vsel %vm432, %v1291, 0
        %v1299 = vsel %vm432, %v1292, 0
        %v1302 = vsel %vm432, %v1293, 0
        %v1305 = vsel %vm432, %v1294, 0
        %1307 = vmatprep.subr.mxu0 0.0
        %1308 = vmatpush1.msra.mxu0 0.0
        %1309 = vmatprep.subr.mxu0 0.0
        %1310 = vmatpush1.msra.mxu0 0.0
        %1311 = vmatprep.subr.mxu0 0.0
        %1312 = vmatpush1.msra.mxu0 0.0
        %1313 = vmatprep.subr.mxu0 0.0
        %1314 = vmatpush1.msra.mxu0 0.0
        %1315 = vmatprep.subr.mxu0 0.0
        %1316 = vmatpush1.msra.mxu0 0.0
        %1317 = vmatprep.subr.mxu0 0.0
        %1318 = vmatpush1.msra.mxu0 0.0
        %1319 = vmatprep.subr.mxu0 0.0
        %1320 = vmatpush1.msra.mxu0 0.0
        %1321 = vmatprep.subr.mxu0 0.0
        %1322 = vmatpush1.msra.mxu0 0.0
        %1323 = vmatprep.subr.mxu0 0.0
        %1324 = vmatpush1.msra.mxu0 0.0
        %1325 = vmatprep.subr.mxu0 0.0
        %1326 = vmatpush1.msra.mxu0 0.0
        %1327 = vmatprep.subr.mxu0 0.0
        %1328 = vmatpush1.msra.mxu0 0.0
        %1329 = vmatprep.subr.mxu0 0.0
        %1330 = vmatpush1.msra.mxu0 0.0
        %1331 = vmatprep.subr.mxu0 0.0
        %1332 = vmatpush1.msra.mxu0 %v1289
        %1333 = vmatprep.subr.mxu0 0.0
        %1334 = vmatpush1.msra.mxu0 %v1288
        %1335 = vmatprep.subr.mxu0 0.0
        %1336 = vmatpush1.msra.mxu0 %v1287
        %1337 = vmatprep.subr.mxu0 0.0
        %1338 = vmatpush1.msra.mxu0 %v1286
        %1339 = vmatprep.subr.mxu0 0.0
        %1340 = vmatpush2.msra.mxu0 0.0
        %1341 = vmatprep.subr.mxu0 0.0
        %1342 = vmatpush2.msra.mxu0 0.0
        %1343 = vmatprep.subr.mxu0 0.0
        %1344 = vmatpush2.msra.mxu0 0.0
        %1345 = vmatprep.subr.mxu0 0.0
        %1346 = vmatpush2.msra.mxu0 0.0
        %1347 = vmatprep.subr.mxu0 0.0
        %1348 = vmatpush2.msra.mxu0 0.0
        %1349 = vmatprep.subr.mxu0 0.0
        %1350 = vmatpush2.msra.mxu0 0.0
        %1351 = vmatprep.subr.mxu0 0.0
        %1352 = vmatpush2.msra.mxu0 0.0
        %1353 = vmatprep.subr.mxu0 0.0
        %1354 = vmatpush2.msra.mxu0 0.0
        %1355 = vmatprep.subr.mxu0 0.0
        %1356 = vmatpush2.msra.mxu0 0.0
        %1357 = vmatprep.subr.mxu0 0.0
        %1358 = vmatpush2.msra.mxu0 0.0
        %1359 = vmatprep.subr.mxu0 0.0
        %1360 = vmatpush2.msra.mxu0 0.0
        %1361 = vmatprep.subr.mxu0 0.0
        %1362 = vmatpush2.msra.mxu0 0.0
        %1363 = vmatprep.subr.mxu0 0.0
        %1364 = vmatpush2.msra.mxu0 0.0
        %1365 = vmatprep.subr.mxu0 0.0
        %1366 = vmatpush2.msra.mxu0 0.0
        %1367 = vmatprep.subr.mxu0 0.0
        %1368 = vmatpush2.msra.mxu0 0.0
        %1369 = vmatprep.subr.mxu0 0.0
        %1370 = vmatpush2.msra.mxu0 0.0
        %1371 = vmatprep.mubr.f32.mxu0 0.0
        %1372 = vmatmul.mubr.f32.gmra.mxu0 %v1296
        %v1373 = vpop.f32.mrf.mxu0
        %v1374 = vadd.f32 0.0, %v1373
        %v1375 = vpop.f32.mrf.mxu0
        %1376 = vmatprep.mubr.f32.mxu0 0.0
        %1377 = vmatmul.mubr.f32.gmra.mxu0 %v1299
        %v1378 = vpop.f32.mrf.mxu0
        %v1379 = vadd.f32 0.0, %v1378
        %v1380 = vpop.f32.mrf.mxu0
        %1381 = vmatprep.mubr.f32.mxu0 0.0
        %1382 = vmatmul.mubr.f32.gmra.mxu0 %v1302
        %v1383 = vpop.f32.mrf.mxu0
        %v1384 = vadd.f32 0.0, %v1383
        %v1385 = vpop.f32.mrf.mxu0
        %1386 = vmatprep.mubr.f32.mxu0 0.0
        %1387 = vmatmul.mubr.f32.gmra.mxu0 %v1305
        %v1388 = vpop.f32.mrf.mxu0
        %v1389 = vadd.f32 0.0, %v1388
        %v1390 = vpop.f32.mrf.mxu0
        %1391 = vdwg.mxu0
        %v1392 = vadd.f32 %v1266, %v1374
        %v1393 = vadd.f32 %v1267, %v1379
        %v1394 = vadd.f32 %v1268, %v1384
        %v1395 = vadd.f32 %v1269, %v1389
        %1396 = vrot.lane.b32.xlu0 %v400, 124
        %v1397 = vpop.permute.xlu0 %1396
        %1398 = vrot.lane.b32.xlu0 %v401, 124
        %v1399 = vpop.permute.xlu0 %1398
        %1400 = vrot.lane.b32.xlu0 %v402, 124
        %v1401 = vpop.permute.xlu0 %1400
        %1402 = vrot.lane.b32.xlu0 %v403, 124
        %v1403 = vpop.permute.xlu0 %1402
        %s1404 = scalar_lea.vmem %s1, 8
        %v1405 = vld [vmem:[%s1404] sm:$0x1]
        %v1407 = vlaneseq
        %v1408 = vshrl.u32 %v1407, 7
        %v1409 = vsub.s32 0, %v1408
        %v1410 = vrot.slane %v1405, %v1409
        %v1412 = vmul.f32 %v1397, %v1410
        %v1413 = vmul.f32 %v1399, %v1410
        %v1414 = vmul.f32 %v1401, %v1410
        %v1415 = vmul.f32 %v1403, %v1410
        %s1416 = scalar_lea.vmem %s233, 256 [#allocation2]
        %v1417 = vld [vmem:[%s1416] sm:$0xff]
        %v1418 = vld [vmem:[%s1416 + $0x8] sm:$0xff]
        %v1419 = vld [vmem:[%s1416 + $0x10] sm:$0xff]
        %v1420 = vld [vmem:[%s1416 + $0x18] sm:$0xff]
        %v1422 = vsel %vm432, %v1417, 0
        %v1425 = vsel %vm432, %v1418, 0
        %v1428 = vsel %vm432, %v1419, 0
        %v1431 = vsel %vm432, %v1420, 0
        %1433 = vmatprep.subr.mxu0 0.0
        %1434 = vmatpush1.msra.mxu0 0.0
        %1435 = vmatprep.subr.mxu0 0.0
        %1436 = vmatpush1.msra.mxu0 0.0
        %1437 = vmatprep.subr.mxu0 0.0
        %1438 = vmatpush1.msra.mxu0 0.0
        %1439 = vmatprep.subr.mxu0 0.0
        %1440 = vmatpush1.msra.mxu0 0.0
        %1441 = vmatprep.subr.mxu0 0.0
        %1442 = vmatpush1.msra.mxu0 0.0
        %1443 = vmatprep.subr.mxu0 0.0
        %1444 = vmatpush1.msra.mxu0 0.0
        %1445 = vmatprep.subr.mxu0 0.0
        %1446 = vmatpush1.msra.mxu0 0.0
        %1447 = vmatprep.subr.mxu0 0.0
        %1448 = vmatpush1.msra.mxu0 0.0
        %1449 = vmatprep.subr.mxu0 0.0
        %1450 = vmatpush1.msra.mxu0 0.0
        %1451 = vmatprep.subr.mxu0 0.0
        %1452 = vmatpush1.msra.mxu0 0.0
        %1453 = vmatprep.subr.mxu0 0.0
        %1454 = vmatpush1.msra.mxu0 0.0
        %1455 = vmatprep.subr.mxu0 0.0
        %1456 = vmatpush1.msra.mxu0 0.0
        %1457 = vmatprep.subr.mxu0 0.0
        %1458 = vmatpush1.msra.mxu0 %v1415
        %1459 = vmatprep.subr.mxu0 0.0
        %1460 = vmatpush1.msra.mxu0 %v1414
        %1461 = vmatprep.subr.mxu0 0.0
        %1462 = vmatpush1.msra.mxu0 %v1413
        %1463 = vmatprep.subr.mxu0 0.0
        %1464 = vmatpush1.msra.mxu0 %v1412
        %1465 = vmatprep.subr.mxu0 0.0
        %1466 = vmatpush2.msra.mxu0 0.0
        %1467 = vmatprep.subr.mxu0 0.0
        %1468 = vmatpush2.msra.mxu0 0.0
        %1469 = vmatprep.subr.mxu0 0.0
        %1470 = vmatpush2.msra.mxu0 0.0
        %1471 = vmatprep.subr.mxu0 0.0
        %1472 = vmatpush2.msra.mxu0 0.0
        %1473 = vmatprep.subr.mxu0 0.0
        %1474 = vmatpush2.msra.mxu0 0.0
        %1475 = vmatprep.subr.mxu0 0.0
        %1476 = vmatpush2.msra.mxu0 0.0
        %1477 = vmatprep.subr.mxu0 0.0
        %1478 = vmatpush2.msra.mxu0 0.0
        %1479 = vmatprep.subr.mxu0 0.0
        %1480 = vmatpush2.msra.mxu0 0.0
        %1481 = vmatprep.subr.mxu0 0.0
        %1482 = vmatpush2.msra.mxu0 0.0
        %1483 = vmatprep.subr.mxu0 0.0
        %1484 = vmatpush2.msra.mxu0 0.0
        %1485 = vmatprep.subr.mxu0 0.0
        %1486 = vmatpush2.msra.mxu0 0.0
        %1487 = vmatprep.subr.mxu0 0.0
        %1488 = vmatpush2.msra.mxu0 0.0
        %1489 = vmatprep.subr.mxu0 0.0
        %1490 = vmatpush2.msra.mxu0 0.0
        %1491 = vmatprep.subr.mxu0 0.0
        %1492 = vmatpush2.msra.mxu0 0.0
        %1493 = vmatprep.subr.mxu0 0.0
        %1494 = vmatpush2.msra.mxu0 0.0
        %1495 = vmatprep.subr.mxu0 0.0
        %1496 = vmatpush2.msra.mxu0 0.0
        %1497 = vmatprep.mubr.f32.mxu0 0.0
        %1498 = vmatmul.mubr.f32.gmra.mxu0 %v1422
        %v1499 = vpop.f32.mrf.mxu0
        %v1500 = vadd.f32 0.0, %v1499
        %v1501 = vpop.f32.mrf.mxu0
        %1502 = vmatprep.mubr.f32.mxu0 0.0
        %1503 = vmatmul.mubr.f32.gmra.mxu0 %v1425
        %v1504 = vpop.f32.mrf.mxu0
        %v1505 = vadd.f32 0.0, %v1504
        %v1506 = vpop.f32.mrf.mxu0
        %1507 = vmatprep.mubr.f32.mxu0 0.0
        %1508 = vmatmul.mubr.f32.gmra.mxu0 %v1428
        %v1509 = vpop.f32.mrf.mxu0
        %v1510 = vadd.f32 0.0, %v1509
        %v1511 = vpop.f32.mrf.mxu0
        %1512 = vmatprep.mubr.f32.mxu0 0.0
        %1513 = vmatmul.mubr.f32.gmra.mxu0 %v1431
        %v1514 = vpop.f32.mrf.mxu0
        %v1515 = vadd.f32 0.0, %v1514
        %v1516 = vpop.f32.mrf.mxu0
        %1517 = vdwg.mxu0
        %v1518 = vadd.f32 %v1392, %v1500
        %v1519 = vadd.f32 %v1393, %v1505
        %v1520 = vadd.f32 %v1394, %v1510
        %v1521 = vadd.f32 %v1395, %v1515
        %v1522 = vmax.f32 %v1518, 0.0
        %v1523 = vmax.f32 %v1519, 0.0
        %v1524 = vmax.f32 %v1520, 0.0
        %v1525 = vmax.f32 %v1521, 0.0
        %s1526 = scalar_lea.vmem %s279, 64
        %v1527 = vld [vmem:[%s1526] sm:$0xff]
        %v1528 = vld [vmem:[%s1526 + $0x8] sm:$0xff]
        %v1529 = vld [vmem:[%s1526 + $0x10] sm:$0xff]
        %v1530 = vld [vmem:[%s1526 + $0x18] sm:$0xff]
        %1531 = vrot.lane.b32.xlu0 %v1522, 4
        %v1532 = vpop.permute.xlu0 %1531
        %1533 = vrot.lane.b32.xlu0 %v1523, 4
        %v1534 = vpop.permute.xlu0 %1533
        %1535 = vrot.lane.b32.xlu0 %v1524, 4
        %v1536 = vpop.permute.xlu0 %1535
        %1537 = vrot.lane.b32.xlu0 %v1525, 4
        %v1538 = vpop.permute.xlu0 %1537
        %v1539 = vmul.f32 %v1532, %v422
        %v1540 = vmul.f32 %v1534, %v422
        %v1541 = vmul.f32 %v1536, %v422
        %v1542 = vmul.f32 %v1538, %v422
        %s1543 = scalar_lea.vmem %s233, 288 [#allocation2]
        %v1544 = vld [vmem:[%s1543] sm:$0xff]
        %v1545 = vld [vmem:[%s1543 + $0x8] sm:$0xff]
        %v1546 = vld [vmem:[%s1543 + $0x10] sm:$0xff]
        %v1547 = vld [vmem:[%s1543 + $0x18] sm:$0xff]
        %v1549 = vsel %vm432, %v1544, 0
        %v1552 = vsel %vm432, %v1545, 0
        %v1555 = vsel %vm432, %v1546, 0
        %v1558 = vsel %vm432, %v1547, 0
        %1560 = vmatprep.subr.mxu0 0.0
        %1561 = vmatpush1.msra.mxu0 0.0
        %1562 = vmatprep.subr.mxu0 0.0
        %1563 = vmatpush1.msra.mxu0 0.0
        %1564 = vmatprep.subr.mxu0 0.0
        %1565 = vmatpush1.msra.mxu0 0.0
        %1566 = vmatprep.subr.mxu0 0.0
        %1567 = vmatpush1.msra.mxu0 0.0
        %1568 = vmatprep.subr.mxu0 0.0
        %1569 = vmatpush1.msra.mxu0 0.0
        %1570 = vmatprep.subr.mxu0 0.0
        %1571 = vmatpush1.msra.mxu0 0.0
        %1572 = vmatprep.subr.mxu0 0.0
        %1573 = vmatpush1.msra.mxu0 0.0
        %1574 = vmatprep.subr.mxu0 0.0
        %1575 = vmatpush1.msra.mxu0 0.0
        %1576 = vmatprep.subr.mxu0 0.0
        %1577 = vmatpush1.msra.mxu0 0.0
        %1578 = vmatprep.subr.mxu0 0.0
        %1579 = vmatpush1.msra.mxu0 0.0
        %1580 = vmatprep.subr.mxu0 0.0
        %1581 = vmatpush1.msra.mxu0 0.0
        %1582 = vmatprep.subr.mxu0 0.0
        %1583 = vmatpush1.msra.mxu0 0.0
        %1584 = vmatprep.subr.mxu0 0.0
        %1585 = vmatpush1.msra.mxu0 %v1542
        %1586 = vmatprep.subr.mxu0 0.0
        %1587 = vmatpush1.msra.mxu0 %v1541
        %1588 = vmatprep.subr.mxu0 0.0
        %1589 = vmatpush1.msra.mxu0 %v1540
        %1590 = vmatprep.subr.mxu0 0.0
        %1591 = vmatpush1.msra.mxu0 %v1539
        %1592 = vmatprep.subr.mxu0 0.0
        %1593 = vmatpush2.msra.mxu0 0.0
        %1594 = vmatprep.subr.mxu0 0.0
        %1595 = vmatpush2.msra.mxu0 0.0
        %1596 = vmatprep.subr.mxu0 0.0
        %1597 = vmatpush2.msra.mxu0 0.0
        %1598 = vmatprep.subr.mxu0 0.0
        %1599 = vmatpush2.msra.mxu0 0.0
        %1600 = vmatprep.subr.mxu0 0.0
        %1601 = vmatpush2.msra.mxu0 0.0
        %1602 = vmatprep.subr.mxu0 0.0
        %1603 = vmatpush2.msra.mxu0 0.0
        %1604 = vmatprep.subr.mxu0 0.0
        %1605 = vmatpush2.msra.mxu0 0.0
        %1606 = vmatprep.subr.mxu0 0.0
        %1607 = vmatpush2.msra.mxu0 0.0
        %1608 = vmatprep.subr.mxu0 0.0
        %1609 = vmatpush2.msra.mxu0 0.0
        %1610 = vmatprep.subr.mxu0 0.0
        %1611 = vmatpush2.msra.mxu0 0.0
        %1612 = vmatprep.subr.mxu0 0.0
        %1613 = vmatpush2.msra.mxu0 0.0
        %1614 = vmatprep.subr.mxu0 0.0
        %1615 = vmatpush2.msra.mxu0 0.0
        %1616 = vmatprep.subr.mxu0 0.0
        %1617 = vmatpush2.msra.mxu0 0.0
        %1618 = vmatprep.subr.mxu0 0.0
        %1619 = vmatpush2.msra.mxu0 0.0
        %1620 = vmatprep.subr.mxu0 0.0
        %1621 = vmatpush2.msra.mxu0 0.0
        %1622 = vmatprep.subr.mxu0 0.0
        %1623 = vmatpush2.msra.mxu0 0.0
        %1624 = vmatprep.mubr.f32.mxu0 0.0
        %1625 = vmatmul.mubr.f32.gmra.mxu0 %v1549
        %v1626 = vpop.f32.mrf.mxu0
        %v1627 = vadd.f32 0.0, %v1626
        %v1628 = vpop.f32.mrf.mxu0
        %1629 = vmatprep.mubr.f32.mxu0 0.0
        %1630 = vmatmul.mubr.f32.gmra.mxu0 %v1552
        %v1631 = vpop.f32.mrf.mxu0
        %v1632 = vadd.f32 0.0, %v1631
        %v1633 = vpop.f32.mrf.mxu0
        %1634 = vmatprep.mubr.f32.mxu0 0.0
        %1635 = vmatmul.mubr.f32.gmra.mxu0 %v1555
        %v1636 = vpop.f32.mrf.mxu0
        %v1637 = vadd.f32 0.0, %v1636
        %v1638 = vpop.f32.mrf.mxu0
        %1639 = vmatprep.mubr.f32.mxu0 0.0
        %1640 = vmatmul.mubr.f32.gmra.mxu0 %v1558
        %v1641 = vpop.f32.mrf.mxu0
        %v1642 = vadd.f32 0.0, %v1641
        %v1643 = vpop.f32.mrf.mxu0
        %1644 = vdwg.mxu0
        %v1645 = vadd.f32 %v1527, %v1627
        %v1646 = vadd.f32 %v1528, %v1632
        %v1647 = vadd.f32 %v1529, %v1637
        %v1648 = vadd.f32 %v1530, %v1642
        %1649 = vrot.lane.b32.xlu0 %v1522, 3
        %v1650 = vpop.permute.xlu0 %1649
        %1651 = vrot.lane.b32.xlu0 %v1523, 3
        %v1652 = vpop.permute.xlu0 %1651
        %1653 = vrot.lane.b32.xlu0 %v1524, 3
        %v1654 = vpop.permute.xlu0 %1653
        %1655 = vrot.lane.b32.xlu0 %v1525, 3
        %v1656 = vpop.permute.xlu0 %1655
        %v1657 = vmul.f32 %v1650, %v548
        %v1658 = vmul.f32 %v1652, %v548
        %v1659 = vmul.f32 %v1654, %v548
        %v1660 = vmul.f32 %v1656, %v548
        %s1661 = scalar_lea.vmem %s233, 320 [#allocation2]
        %v1662 = vld [vmem:[%s1661] sm:$0xff]
        %v1663 = vld [vmem:[%s1661 + $0x8] sm:$0xff]
        %v1664 = vld [vmem:[%s1661 + $0x10] sm:$0xff]
        %v1665 = vld [vmem:[%s1661 + $0x18] sm:$0xff]
        %v1667 = vsel %vm432, %v1662, 0
        %v1670 = vsel %vm432, %v1663, 0
        %v1673 = vsel %vm432, %v1664, 0
        %v1676 = vsel %vm432, %v1665, 0
        %1678 = vmatprep.subr.mxu0 0.0
        %1679 = vmatpush1.msra.mxu0 0.0
        %1680 = vmatprep.subr.mxu0 0.0
        %1681 = vmatpush1.msra.mxu0 0.0
        %1682 = vmatprep.subr.mxu0 0.0
        %1683 = vmatpush1.msra.mxu0 0.0
        %1684 = vmatprep.subr.mxu0 0.0
        %1685 = vmatpush1.msra.mxu0 0.0
        %1686 = vmatprep.subr.mxu0 0.0
        %1687 = vmatpush1.msra.mxu0 0.0
        %1688 = vmatprep.subr.mxu0 0.0
        %1689 = vmatpush1.msra.mxu0 0.0
        %1690 = vmatprep.subr.mxu0 0.0
        %1691 = vmatpush1.msra.mxu0 0.0
        %1692 = vmatprep.subr.mxu0 0.0
        %1693 = vmatpush1.msra.mxu0 0.0
        %1694 = vmatprep.subr.mxu0 0.0
        %1695 = vmatpush1.msra.mxu0 0.0
        %1696 = vmatprep.subr.mxu0 0.0
        %1697 = vmatpush1.msra.mxu0 0.0
        %1698 = vmatprep.subr.mxu0 0.0
        %1699 = vmatpush1.msra.mxu0 0.0
        %1700 = vmatprep.subr.mxu0 0.0
        %1701 = vmatpush1.msra.mxu0 0.0
        %1702 = vmatprep.subr.mxu0 0.0
        %1703 = vmatpush1.msra.mxu0 %v1660
        %1704 = vmatprep.subr.mxu0 0.0
        %1705 = vmatpush1.msra.mxu0 %v1659
        %1706 = vmatprep.subr.mxu0 0.0
        %1707 = vmatpush1.msra.mxu0 %v1658
        %1708 = vmatprep.subr.mxu0 0.0
        %1709 = vmatpush1.msra.mxu0 %v1657
        %1710 = vmatprep.subr.mxu0 0.0
        %1711 = vmatpush2.msra.mxu0 0.0
        %1712 = vmatprep.subr.mxu0 0.0
        %1713 = vmatpush2.msra.mxu0 0.0
        %1714 = vmatprep.subr.mxu0 0.0
        %1715 = vmatpush2.msra.mxu0 0.0
        %1716 = vmatprep.subr.mxu0 0.0
        %1717 = vmatpush2.msra.mxu0 0.0
        %1718 = vmatprep.subr.mxu0 0.0
        %1719 = vmatpush2.msra.mxu0 0.0
        %1720 = vmatprep.subr.mxu0 0.0
        %1721 = vmatpush2.msra.mxu0 0.0
        %1722 = vmatprep.subr.mxu0 0.0
        %1723 = vmatpush2.msra.mxu0 0.0
        %1724 = vmatprep.subr.mxu0 0.0
        %1725 = vmatpush2.msra.mxu0 0.0
        %1726 = vmatprep.subr.mxu0 0.0
        %1727 = vmatpush2.msra.mxu0 0.0
        %1728 = vmatprep.subr.mxu0 0.0
        %1729 = vmatpush2.msra.mxu0 0.0
        %1730 = vmatprep.subr.mxu0 0.0
        %1731 = vmatpush2.msra.mxu0 0.0
        %1732 = vmatprep.subr.mxu0 0.0
        %1733 = vmatpush2.msra.mxu0 0.0
        %1734 = vmatprep.subr.mxu0 0.0
        %1735 = vmatpush2.msra.mxu0 0.0
        %1736 = vmatprep.subr.mxu0 0.0
        %1737 = vmatpush2.msra.mxu0 0.0
        %1738 = vmatprep.subr.mxu0 0.0
        %1739 = vmatpush2.msra.mxu0 0.0
        %1740 = vmatprep.subr.mxu0 0.0
        %1741 = vmatpush2.msra.mxu0 0.0
        %1742 = vmatprep.mubr.f32.mxu0 0.0
        %1743 = vmatmul.mubr.f32.gmra.mxu0 %v1667
        %v1744 = vpop.f32.mrf.mxu0
        %v1745 = vadd.f32 0.0, %v1744
        %v1746 = vpop.f32.mrf.mxu0
        %1747 = vmatprep.mubr.f32.mxu0 0.0
        %1748 = vmatmul.mubr.f32.gmra.mxu0 %v1670
        %v1749 = vpop.f32.mrf.mxu0
        %v1750 = vadd.f32 0.0, %v1749
        %v1751 = vpop.f32.mrf.mxu0
        %1752 = vmatprep.mubr.f32.mxu0 0.0
        %1753 = vmatmul.mubr.f32.gmra.mxu0 %v1673
        %v1754 = vpop.f32.mrf.mxu0
        %v1755 = vadd.f32 0.0, %v1754
        %v1756 = vpop.f32.mrf.mxu0
        %1757 = vmatprep.mubr.f32.mxu0 0.0
        %1758 = vmatmul.mubr.f32.gmra.mxu0 %v1676
        %v1759 = vpop.f32.mrf.mxu0
        %v1760 = vadd.f32 0.0, %v1759
        %v1761 = vpop.f32.mrf.mxu0
        %1762 = vdwg.mxu0
        %v1763 = vadd.f32 %v1645, %v1745
        %v1764 = vadd.f32 %v1646, %v1750
        %v1765 = vadd.f32 %v1647, %v1755
        %v1766 = vadd.f32 %v1648, %v1760
        %1767 = vrot.lane.b32.xlu0 %v1522, 2
        %v1768 = vpop.permute.xlu0 %1767
        %1769 = vrot.lane.b32.xlu0 %v1523, 2
        %v1770 = vpop.permute.xlu0 %1769
        %1771 = vrot.lane.b32.xlu0 %v1524, 2
        %v1772 = vpop.permute.xlu0 %1771
        %1773 = vrot.lane.b32.xlu0 %v1525, 2
        %v1774 = vpop.permute.xlu0 %1773
        %v1775 = vmul.f32 %v1768, %v674
        %v1776 = vmul.f32 %v1770, %v674
        %v1777 = vmul.f32 %v1772, %v674
        %v1778 = vmul.f32 %v1774, %v674
        %s1779 = scalar_lea.vmem %s233, 352 [#allocation2]
        %v1780 = vld [vmem:[%s1779] sm:$0xff]
        %v1781 = vld [vmem:[%s1779 + $0x8] sm:$0xff]
        %v1782 = vld [vmem:[%s1779 + $0x10] sm:$0xff]
        %v1783 = vld [vmem:[%s1779 + $0x18] sm:$0xff]
        %v1785 = vsel %vm432, %v1780, 0
        %v1788 = vsel %vm432, %v1781, 0
        %v1791 = vsel %vm432, %v1782, 0
        %v1794 = vsel %vm432, %v1783, 0
        %1796 = vmatprep.subr.mxu0 0.0
        %1797 = vmatpush1.msra.mxu0 0.0
        %1798 = vmatprep.subr.mxu0 0.0
        %1799 = vmatpush1.msra.mxu0 0.0
        %1800 = vmatprep.subr.mxu0 0.0
        %1801 = vmatpush1.msra.mxu0 0.0
        %1802 = vmatprep.subr.mxu0 0.0
        %1803 = vmatpush1.msra.mxu0 0.0
        %1804 = vmatprep.subr.mxu0 0.0
        %1805 = vmatpush1.msra.mxu0 0.0
        %1806 = vmatprep.subr.mxu0 0.0
        %1807 = vmatpush1.msra.mxu0 0.0
        %1808 = vmatprep.subr.mxu0 0.0
        %1809 = vmatpush1.msra.mxu0 0.0
        %1810 = vmatprep.subr.mxu0 0.0
        %1811 = vmatpush1.msra.mxu0 0.0
        %1812 = vmatprep.subr.mxu0 0.0
        %1813 = vmatpush1.msra.mxu0 0.0
        %1814 = vmatprep.subr.mxu0 0.0
        %1815 = vmatpush1.msra.mxu0 0.0
        %1816 = vmatprep.subr.mxu0 0.0
        %1817 = vmatpush1.msra.mxu0 0.0
        %1818 = vmatprep.subr.mxu0 0.0
        %1819 = vmatpush1.msra.mxu0 0.0
        %1820 = vmatprep.subr.mxu0 0.0
        %1821 = vmatpush1.msra.mxu0 %v1778
        %1822 = vmatprep.subr.mxu0 0.0
        %1823 = vmatpush1.msra.mxu0 %v1777
        %1824 = vmatprep.subr.mxu0 0.0
        %1825 = vmatpush1.msra.mxu0 %v1776
        %1826 = vmatprep.subr.mxu0 0.0
        %1827 = vmatpush1.msra.mxu0 %v1775
        %1828 = vmatprep.subr.mxu0 0.0
        %1829 = vmatpush2.msra.mxu0 0.0
        %1830 = vmatprep.subr.mxu0 0.0
        %1831 = vmatpush2.msra.mxu0 0.0
        %1832 = vmatprep.subr.mxu0 0.0
        %1833 = vmatpush2.msra.mxu0 0.0
        %1834 = vmatprep.subr.mxu0 0.0
        %1835 = vmatpush2.msra.mxu0 0.0
        %1836 = vmatprep.subr.mxu0 0.0
        %1837 = vmatpush2.msra.mxu0 0.0
        %1838 = vmatprep.subr.mxu0 0.0
        %1839 = vmatpush2.msra.mxu0 0.0
        %1840 = vmatprep.subr.mxu0 0.0
        %1841 = vmatpush2.msra.mxu0 0.0
        %1842 = vmatprep.subr.mxu0 0.0
        %1843 = vmatpush2.msra.mxu0 0.0
        %1844 = vmatprep.subr.mxu0 0.0
        %1845 = vmatpush2.msra.mxu0 0.0
        %1846 = vmatprep.subr.mxu0 0.0
        %1847 = vmatpush2.msra.mxu0 0.0
        %1848 = vmatprep.subr.mxu0 0.0
        %1849 = vmatpush2.msra.mxu0 0.0
        %1850 = vmatprep.subr.mxu0 0.0
        %1851 = vmatpush2.msra.mxu0 0.0
        %1852 = vmatprep.subr.mxu0 0.0
        %1853 = vmatpush2.msra.mxu0 0.0
        %1854 = vmatprep.subr.mxu0 0.0
        %1855 = vmatpush2.msra.mxu0 0.0
        %1856 = vmatprep.subr.mxu0 0.0
        %1857 = vmatpush2.msra.mxu0 0.0
        %1858 = vmatprep.subr.mxu0 0.0
        %1859 = vmatpush2.msra.mxu0 0.0
        %1860 = vmatprep.mubr.f32.mxu0 0.0
        %1861 = vmatmul.mubr.f32.gmra.mxu0 %v1785
        %v1862 = vpop.f32.mrf.mxu0
        %v1863 = vadd.f32 0.0, %v1862
        %v1864 = vpop.f32.mrf.mxu0
        %1865 = vmatprep.mubr.f32.mxu0 0.0
        %1866 = vmatmul.mubr.f32.gmra.mxu0 %v1788
        %v1867 = vpop.f32.mrf.mxu0
        %v1868 = vadd.f32 0.0, %v1867
        %v1869 = vpop.f32.mrf.mxu0
        %1870 = vmatprep.mubr.f32.mxu0 0.0
        %1871 = vmatmul.mubr.f32.gmra.mxu0 %v1791
        %v1872 = vpop.f32.mrf.mxu0
        %v1873 = vadd.f32 0.0, %v1872
        %v1874 = vpop.f32.mrf.mxu0
        %1875 = vmatprep.mubr.f32.mxu0 0.0
        %1876 = vmatmul.mubr.f32.gmra.mxu0 %v1794
        %v1877 = vpop.f32.mrf.mxu0
        %v1878 = vadd.f32 0.0, %v1877
        %v1879 = vpop.f32.mrf.mxu0
        %1880 = vdwg.mxu0
        %v1881 = vadd.f32 %v1763, %v1863
        %v1882 = vadd.f32 %v1764, %v1868
        %v1883 = vadd.f32 %v1765, %v1873
        %v1884 = vadd.f32 %v1766, %v1878
        %1885 = vrot.lane.b32.xlu0 %v1522, 1
        %v1886 = vpop.permute.xlu0 %1885
        %1887 = vrot.lane.b32.xlu0 %v1523, 1
        %v1888 = vpop.permute.xlu0 %1887
        %1889 = vrot.lane.b32.xlu0 %v1524, 1
        %v1890 = vpop.permute.xlu0 %1889
        %1891 = vrot.lane.b32.xlu0 %v1525, 1
        %v1892 = vpop.permute.xlu0 %1891
        %v1893 = vmul.f32 %v1886, %v800
        %v1894 = vmul.f32 %v1888, %v800
        %v1895 = vmul.f32 %v1890, %v800
        %v1896 = vmul.f32 %v1892, %v800
        %s1897 = scalar_lea.vmem %s233, 384 [#allocation2]
        %v1898 = vld [vmem:[%s1897] sm:$0xff]
        %v1899 = vld [vmem:[%s1897 + $0x8] sm:$0xff]
        %v1900 = vld [vmem:[%s1897 + $0x10] sm:$0xff]
        %v1901 = vld [vmem:[%s1897 + $0x18] sm:$0xff]
        %v1903 = vsel %vm432, %v1898, 0
        %v1906 = vsel %vm432, %v1899, 0
        %v1909 = vsel %vm432, %v1900, 0
        %v1912 = vsel %vm432, %v1901, 0
        %1914 = vmatprep.subr.mxu0 0.0
        %1915 = vmatpush1.msra.mxu0 0.0
        %1916 = vmatprep.subr.mxu0 0.0
        %1917 = vmatpush1.msra.mxu0 0.0
        %1918 = vmatprep.subr.mxu0 0.0
        %1919 = vmatpush1.msra.mxu0 0.0
        %1920 = vmatprep.subr.mxu0 0.0
        %1921 = vmatpush1.msra.mxu0 0.0
        %1922 = vmatprep.subr.mxu0 0.0
        %1923 = vmatpush1.msra.mxu0 0.0
        %1924 = vmatprep.subr.mxu0 0.0
        %1925 = vmatpush1.msra.mxu0 0.0
        %1926 = vmatprep.subr.mxu0 0.0
        %1927 = vmatpush1.msra.mxu0 0.0
        %1928 = vmatprep.subr.mxu0 0.0
        %1929 = vmatpush1.msra.mxu0 0.0
        %1930 = vmatprep.subr.mxu0 0.0
        %1931 = vmatpush1.msra.mxu0 0.0
        %1932 = vmatprep.subr.mxu0 0.0
        %1933 = vmatpush1.msra.mxu0 0.0
        %1934 = vmatprep.subr.mxu0 0.0
        %1935 = vmatpush1.msra.mxu0 0.0
        %1936 = vmatprep.subr.mxu0 0.0
        %1937 = vmatpush1.msra.mxu0 0.0
        %1938 = vmatprep.subr.mxu0 0.0
        %1939 = vmatpush1.msra.mxu0 %v1896
        %1940 = vmatprep.subr.mxu0 0.0
        %1941 = vmatpush1.msra.mxu0 %v1895
        %1942 = vmatprep.subr.mxu0 0.0
        %1943 = vmatpush1.msra.mxu0 %v1894
        %1944 = vmatprep.subr.mxu0 0.0
        %1945 = vmatpush1.msra.mxu0 %v1893
        %1946 = vmatprep.subr.mxu0 0.0
        %1947 = vmatpush2.msra.mxu0 0.0
        %1948 = vmatprep.subr.mxu0 0.0
        %1949 = vmatpush2.msra.mxu0 0.0
        %1950 = vmatprep.subr.mxu0 0.0
        %1951 = vmatpush2.msra.mxu0 0.0
        %1952 = vmatprep.subr.mxu0 0.0
        %1953 = vmatpush2.msra.mxu0 0.0
        %1954 = vmatprep.subr.mxu0 0.0
        %1955 = vmatpush2.msra.mxu0 0.0
        %1956 = vmatprep.subr.mxu0 0.0
        %1957 = vmatpush2.msra.mxu0 0.0
        %1958 = vmatprep.subr.mxu0 0.0
        %1959 = vmatpush2.msra.mxu0 0.0
        %1960 = vmatprep.subr.mxu0 0.0
        %1961 = vmatpush2.msra.mxu0 0.0
        %1962 = vmatprep.subr.mxu0 0.0
        %1963 = vmatpush2.msra.mxu0 0.0
        %1964 = vmatprep.subr.mxu0 0.0
        %1965 = vmatpush2.msra.mxu0 0.0
        %1966 = vmatprep.subr.mxu0 0.0
        %1967 = vmatpush2.msra.mxu0 0.0
        %1968 = vmatprep.subr.mxu0 0.0
        %1969 = vmatpush2.msra.mxu0 0.0
        %1970 = vmatprep.subr.mxu0 0.0
        %1971 = vmatpush2.msra.mxu0 0.0
        %1972 = vmatprep.subr.mxu0 0.0
        %1973 = vmatpush2.msra.mxu0 0.0
        %1974 = vmatprep.subr.mxu0 0.0
        %1975 = vmatpush2.msra.mxu0 0.0
        %1976 = vmatprep.subr.mxu0 0.0
        %1977 = vmatpush2.msra.mxu0 0.0
        %1978 = vmatprep.mubr.f32.mxu0 0.0
        %1979 = vmatmul.mubr.f32.gmra.mxu0 %v1903
        %v1980 = vpop.f32.mrf.mxu0
        %v1981 = vadd.f32 0.0, %v1980
        %v1982 = vpop.f32.mrf.mxu0
        %1983 = vmatprep.mubr.f32.mxu0 0.0
        %1984 = vmatmul.mubr.f32.gmra.mxu0 %v1906
        %v1985 = vpop.f32.mrf.mxu0
        %v1986 = vadd.f32 0.0, %v1985
        %v1987 = vpop.f32.mrf.mxu0
        %1988 = vmatprep.mubr.f32.mxu0 0.0
        %1989 = vmatmul.mubr.f32.gmra.mxu0 %v1909
        %v1990 = vpop.f32.mrf.mxu0
        %v1991 = vadd.f32 0.0, %v1990
        %v1992 = vpop.f32.mrf.mxu0
        %1993 = vmatprep.mubr.f32.mxu0 0.0
        %1994 = vmatmul.mubr.f32.gmra.mxu0 %v1912
        %v1995 = vpop.f32.mrf.mxu0
        %v1996 = vadd.f32 0.0, %v1995
        %v1997 = vpop.f32.mrf.mxu0
        %1998 = vdwg.mxu0
        %v1999 = vadd.f32 %v1881, %v1981
        %v2000 = vadd.f32 %v1882, %v1986
        %v2001 = vadd.f32 %v1883, %v1991
        %v2002 = vadd.f32 %v1884, %v1996
        %s2003 = scalar_lea.vmem %s233, 416 [#allocation2]
        %v2004 = vld [vmem:[%s2003] sm:$0xff]
        %v2005 = vld [vmem:[%s2003 + $0x8] sm:$0xff]
        %v2006 = vld [vmem:[%s2003 + $0x10] sm:$0xff]
        %v2007 = vld [vmem:[%s2003 + $0x18] sm:$0xff]
        %v2009 = vsel %vm432, %v2004, 0
        %v2012 = vsel %vm432, %v2005, 0
        %v2015 = vsel %vm432, %v2006, 0
        %v2018 = vsel %vm432, %v2007, 0
        %2020 = vmatprep.subr.mxu0 0.0
        %2021 = vmatpush1.msra.mxu0 0.0
        %2022 = vmatprep.subr.mxu0 0.0
        %2023 = vmatpush1.msra.mxu0 0.0
        %2024 = vmatprep.subr.mxu0 0.0
        %2025 = vmatpush1.msra.mxu0 0.0
        %2026 = vmatprep.subr.mxu0 0.0
        %2027 = vmatpush1.msra.mxu0 0.0
        %2028 = vmatprep.subr.mxu0 0.0
        %2029 = vmatpush1.msra.mxu0 0.0
        %2030 = vmatprep.subr.mxu0 0.0
        %2031 = vmatpush1.msra.mxu0 0.0
        %2032 = vmatprep.subr.mxu0 0.0
        %2033 = vmatpush1.msra.mxu0 0.0
        %2034 = vmatprep.subr.mxu0 0.0
        %2035 = vmatpush1.msra.mxu0 0.0
        %2036 = vmatprep.subr.mxu0 0.0
        %2037 = vmatpush1.msra.mxu0 0.0
        %2038 = vmatprep.subr.mxu0 0.0
        %2039 = vmatpush1.msra.mxu0 0.0
        %2040 = vmatprep.subr.mxu0 0.0
        %2041 = vmatpush1.msra.mxu0 0.0
        %2042 = vmatprep.subr.mxu0 0.0
        %2043 = vmatpush1.msra.mxu0 0.0
        %2044 = vmatprep.subr.mxu0 0.0
        %2045 = vmatpush1.msra.mxu0 %v1525
        %2046 = vmatprep.subr.mxu0 0.0
        %2047 = vmatpush1.msra.mxu0 %v1524
        %2048 = vmatprep.subr.mxu0 0.0
        %2049 = vmatpush1.msra.mxu0 %v1523
        %2050 = vmatprep.subr.mxu0 0.0
        %2051 = vmatpush1.msra.mxu0 %v1522
        %2052 = vmatprep.subr.mxu0 0.0
        %2053 = vmatpush2.msra.mxu0 0.0
        %2054 = vmatprep.subr.mxu0 0.0
        %2055 = vmatpush2.msra.mxu0 0.0
        %2056 = vmatprep.subr.mxu0 0.0
        %2057 = vmatpush2.msra.mxu0 0.0
        %2058 = vmatprep.subr.mxu0 0.0
        %2059 = vmatpush2.msra.mxu0 0.0
        %2060 = vmatprep.subr.mxu0 0.0
        %2061 = vmatpush2.msra.mxu0 0.0
        %2062 = vmatprep.subr.mxu0 0.0
        %2063 = vmatpush2.msra.mxu0 0.0
        %2064 = vmatprep.subr.mxu0 0.0
        %2065 = vmatpush2.msra.mxu0 0.0
        %2066 = vmatprep.subr.mxu0 0.0
        %2067 = vmatpush2.msra.mxu0 0.0
        %2068 = vmatprep.subr.mxu0 0.0
        %2069 = vmatpush2.msra.mxu0 0.0
        %2070 = vmatprep.subr.mxu0 0.0
        %2071 = vmatpush2.msra.mxu0 0.0
        %2072 = vmatprep.subr.mxu0 0.0
        %2073 = vmatpush2.msra.mxu0 0.0
        %2074 = vmatprep.subr.mxu0 0.0
        %2075 = vmatpush2.msra.mxu0 0.0
        %2076 = vmatprep.subr.mxu0 0.0
        %2077 = vmatpush2.msra.mxu0 0.0
        %2078 = vmatprep.subr.mxu0 0.0
        %2079 = vmatpush2.msra.mxu0 0.0
        %2080 = vmatprep.subr.mxu0 0.0
        %2081 = vmatpush2.msra.mxu0 0.0
        %2082 = vmatprep.subr.mxu0 0.0
        %2083 = vmatpush2.msra.mxu0 0.0
        %2084 = vmatprep.mubr.f32.mxu0 0.0
        %2085 = vmatmul.mubr.f32.gmra.mxu0 %v2009
        %v2086 = vpop.f32.mrf.mxu0
        %v2087 = vadd.f32 0.0, %v2086
        %v2088 = vpop.f32.mrf.mxu0
        %2089 = vmatprep.mubr.f32.mxu0 0.0
        %2090 = vmatmul.mubr.f32.gmra.mxu0 %v2012
        %v2091 = vpop.f32.mrf.mxu0
        %v2092 = vadd.f32 0.0, %v2091
        %v2093 = vpop.f32.mrf.mxu0
        %2094 = vmatprep.mubr.f32.mxu0 0.0
        %2095 = vmatmul.mubr.f32.gmra.mxu0 %v2015
        %v2096 = vpop.f32.mrf.mxu0
        %v2097 = vadd.f32 0.0, %v2096
        %v2098 = vpop.f32.mrf.mxu0
        %2099 = vmatprep.mubr.f32.mxu0 0.0
        %2100 = vmatmul.mubr.f32.gmra.mxu0 %v2018
        %v2101 = vpop.f32.mrf.mxu0
        %v2102 = vadd.f32 0.0, %v2101
        %v2103 = vpop.f32.mrf.mxu0
        %2104 = vdwg.mxu0
        %v2105 = vadd.f32 %v1999, %v2087
        %v2106 = vadd.f32 %v2000, %v2092
        %v2107 = vadd.f32 %v2001, %v2097
        %v2108 = vadd.f32 %v2002, %v2102
        %2109 = vrot.lane.b32.xlu0 %v1522, 127
        %v2110 = vpop.permute.xlu0 %2109
        %2111 = vrot.lane.b32.xlu0 %v1523, 127
        %v2112 = vpop.permute.xlu0 %2111
        %2113 = vrot.lane.b32.xlu0 %v1524, 127
        %v2114 = vpop.permute.xlu0 %2113
        %2115 = vrot.lane.b32.xlu0 %v1525, 127
        %v2116 = vpop.permute.xlu0 %2115
        %v2117 = vmul.f32 %v2110, %v1032
        %v2118 = vmul.f32 %v2112, %v1032
        %v2119 = vmul.f32 %v2114, %v1032
        %v2120 = vmul.f32 %v2116, %v1032
        %s2121 = scalar_lea.vmem %s233, 448 [#allocation2]
        %v2122 = vld [vmem:[%s2121] sm:$0xff]
        %v2123 = vld [vmem:[%s2121 + $0x8] sm:$0xff]
        %v2124 = vld [vmem:[%s2121 + $0x10] sm:$0xff]
        %v2125 = vld [vmem:[%s2121 + $0x18] sm:$0xff]
        %v2127 = vsel %vm432, %v2122, 0
        %v2130 = vsel %vm432, %v2123, 0
        %v2133 = vsel %vm432, %v2124, 0
        %v2136 = vsel %vm432, %v2125, 0
        %2138 = vmatprep.subr.mxu0 0.0
        %2139 = vmatpush1.msra.mxu0 0.0
        %2140 = vmatprep.subr.mxu0 0.0
        %2141 = vmatpush1.msra.mxu0 0.0
        %2142 = vmatprep.subr.mxu0 0.0
        %2143 = vmatpush1.msra.mxu0 0.0
        %2144 = vmatprep.subr.mxu0 0.0
        %2145 = vmatpush1.msra.mxu0 0.0
        %2146 = vmatprep.subr.mxu0 0.0
        %2147 = vmatpush1.msra.mxu0 0.0
        %2148 = vmatprep.subr.mxu0 0.0
        %2149 = vmatpush1.msra.mxu0 0.0
        %2150 = vmatprep.subr.mxu0 0.0
        %2151 = vmatpush1.msra.mxu0 0.0
        %2152 = vmatprep.subr.mxu0 0.0
        %2153 = vmatpush1.msra.mxu0 0.0
        %2154 = vmatprep.subr.mxu0 0.0
        %2155 = vmatpush1.msra.mxu0 0.0
        %2156 = vmatprep.subr.mxu0 0.0
        %2157 = vmatpush1.msra.mxu0 0.0
        %2158 = vmatprep.subr.mxu0 0.0
        %2159 = vmatpush1.msra.mxu0 0.0
        %2160 = vmatprep.subr.mxu0 0.0
        %2161 = vmatpush1.msra.mxu0 0.0
        %2162 = vmatprep.subr.mxu0 0.0
        %2163 = vmatpush1.msra.mxu0 %v2120
        %2164 = vmatprep.subr.mxu0 0.0
        %2165 = vmatpush1.msra.mxu0 %v2119
        %2166 = vmatprep.subr.mxu0 0.0
        %2167 = vmatpush1.msra.mxu0 %v2118
        %2168 = vmatprep.subr.mxu0 0.0
        %2169 = vmatpush1.msra.mxu0 %v2117
        %2170 = vmatprep.subr.mxu0 0.0
        %2171 = vmatpush2.msra.mxu0 0.0
        %2172 = vmatprep.subr.mxu0 0.0
        %2173 = vmatpush2.msra.mxu0 0.0
        %2174 = vmatprep.subr.mxu0 0.0
        %2175 = vmatpush2.msra.mxu0 0.0
        %2176 = vmatprep.subr.mxu0 0.0
        %2177 = vmatpush2.msra.mxu0 0.0
        %2178 = vmatprep.subr.mxu0 0.0
        %2179 = vmatpush2.msra.mxu0 0.0
        %2180 = vmatprep.subr.mxu0 0.0
        %2181 = vmatpush2.msra.mxu0 0.0
        %2182 = vmatprep.subr.mxu0 0.0
        %2183 = vmatpush2.msra.mxu0 0.0
        %2184 = vmatprep.subr.mxu0 0.0
        %2185 = vmatpush2.msra.mxu0 0.0
        %2186 = vmatprep.subr.mxu0 0.0
        %2187 = vmatpush2.msra.mxu0 0.0
        %2188 = vmatprep.subr.mxu0 0.0
        %2189 = vmatpush2.msra.mxu0 0.0
        %2190 = vmatprep.subr.mxu0 0.0
        %2191 = vmatpush2.msra.mxu0 0.0
        %2192 = vmatprep.subr.mxu0 0.0
        %2193 = vmatpush2.msra.mxu0 0.0
        %2194 = vmatprep.subr.mxu0 0.0
        %2195 = vmatpush2.msra.mxu0 0.0
        %2196 = vmatprep.subr.mxu0 0.0
        %2197 = vmatpush2.msra.mxu0 0.0
        %2198 = vmatprep.subr.mxu0 0.0
        %2199 = vmatpush2.msra.mxu0 0.0
        %2200 = vmatprep.subr.mxu0 0.0
        %2201 = vmatpush2.msra.mxu0 0.0
        %2202 = vmatprep.mubr.f32.mxu0 0.0
        %2203 = vmatmul.mubr.f32.gmra.mxu0 %v2127
        %v2204 = vpop.f32.mrf.mxu0
        %v2205 = vadd.f32 0.0, %v2204
        %v2206 = vpop.f32.mrf.mxu0
        %2207 = vmatprep.mubr.f32.mxu0 0.0
        %2208 = vmatmul.mubr.f32.gmra.mxu0 %v2130
        %v2209 = vpop.f32.mrf.mxu0
        %v2210 = vadd.f32 0.0, %v2209
        %v2211 = vpop.f32.mrf.mxu0
        %2212 = vmatprep.mubr.f32.mxu0 0.0
        %2213 = vmatmul.mubr.f32.gmra.mxu0 %v2133
        %v2214 = vpop.f32.mrf.mxu0
        %v2215 = vadd.f32 0.0, %v2214
        %v2216 = vpop.f32.mrf.mxu0
        %2217 = vmatprep.mubr.f32.mxu0 0.0
        %2218 = vmatmul.mubr.f32.gmra.mxu0 %v2136
        %v2219 = vpop.f32.mrf.mxu0
        %v2220 = vadd.f32 0.0, %v2219
        %v2221 = vpop.f32.mrf.mxu0
        %2222 = vdwg.mxu0
        %v2223 = vadd.f32 %v2105, %v2205
        %v2224 = vadd.f32 %v2106, %v2210
        %v2225 = vadd.f32 %v2107, %v2215
        %v2226 = vadd.f32 %v2108, %v2220
        %2227 = vrot.lane.b32.xlu0 %v1522, 126
        %v2228 = vpop.permute.xlu0 %2227
        %2229 = vrot.lane.b32.xlu0 %v1523, 126
        %v2230 = vpop.permute.xlu0 %2229
        %2231 = vrot.lane.b32.xlu0 %v1524, 126
        %v2232 = vpop.permute.xlu0 %2231
        %2233 = vrot.lane.b32.xlu0 %v1525, 126
        %v2234 = vpop.permute.xlu0 %2233
        %v2235 = vmul.f32 %v2228, %v1158
        %v2236 = vmul.f32 %v2230, %v1158
        %v2237 = vmul.f32 %v2232, %v1158
        %v2238 = vmul.f32 %v2234, %v1158
        %s2239 = scalar_lea.vmem %s233, 480 [#allocation2]
        %v2240 = vld [vmem:[%s2239] sm:$0xff]
        %v2241 = vld [vmem:[%s2239 + $0x8] sm:$0xff]
        %v2242 = vld [vmem:[%s2239 + $0x10] sm:$0xff]
        %v2243 = vld [vmem:[%s2239 + $0x18] sm:$0xff]
        %v2245 = vsel %vm432, %v2240, 0
        %v2248 = vsel %vm432, %v2241, 0
        %v2251 = vsel %vm432, %v2242, 0
        %v2254 = vsel %vm432, %v2243, 0
        %2256 = vmatprep.subr.mxu0 0.0
        %2257 = vmatpush1.msra.mxu0 0.0
        %2258 = vmatprep.subr.mxu0 0.0
        %2259 = vmatpush1.msra.mxu0 0.0
        %2260 = vmatprep.subr.mxu0 0.0
        %2261 = vmatpush1.msra.mxu0 0.0
        %2262 = vmatprep.subr.mxu0 0.0
        %2263 = vmatpush1.msra.mxu0 0.0
        %2264 = vmatprep.subr.mxu0 0.0
        %2265 = vmatpush1.msra.mxu0 0.0
        %2266 = vmatprep.subr.mxu0 0.0
        %2267 = vmatpush1.msra.mxu0 0.0
        %2268 = vmatprep.subr.mxu0 0.0
        %2269 = vmatpush1.msra.mxu0 0.0
        %2270 = vmatprep.subr.mxu0 0.0
        %2271 = vmatpush1.msra.mxu0 0.0
        %2272 = vmatprep.subr.mxu0 0.0
        %2273 = vmatpush1.msra.mxu0 0.0
        %2274 = vmatprep.subr.mxu0 0.0
        %2275 = vmatpush1.msra.mxu0 0.0
        %2276 = vmatprep.subr.mxu0 0.0
        %2277 = vmatpush1.msra.mxu0 0.0
        %2278 = vmatprep.subr.mxu0 0.0
        %2279 = vmatpush1.msra.mxu0 0.0
        %2280 = vmatprep.subr.mxu0 0.0
        %2281 = vmatpush1.msra.mxu0 %v2238
        %2282 = vmatprep.subr.mxu0 0.0
        %2283 = vmatpush1.msra.mxu0 %v2237
        %2284 = vmatprep.subr.mxu0 0.0
        %2285 = vmatpush1.msra.mxu0 %v2236
        %2286 = vmatprep.subr.mxu0 0.0
        %2287 = vmatpush1.msra.mxu0 %v2235
        %2288 = vmatprep.subr.mxu0 0.0
        %2289 = vmatpush2.msra.mxu0 0.0
        %2290 = vmatprep.subr.mxu0 0.0
        %2291 = vmatpush2.msra.mxu0 0.0
        %2292 = vmatprep.subr.mxu0 0.0
        %2293 = vmatpush2.msra.mxu0 0.0
        %2294 = vmatprep.subr.mxu0 0.0
        %2295 = vmatpush2.msra.mxu0 0.0
        %2296 = vmatprep.subr.mxu0 0.0
        %2297 = vmatpush2.msra.mxu0 0.0
        %2298 = vmatprep.subr.mxu0 0.0
        %2299 = vmatpush2.msra.mxu0 0.0
        %2300 = vmatprep.subr.mxu0 0.0
        %2301 = vmatpush2.msra.mxu0 0.0
        %2302 = vmatprep.subr.mxu0 0.0
        %2303 = vmatpush2.msra.mxu0 0.0
        %2304 = vmatprep.subr.mxu0 0.0
        %2305 = vmatpush2.msra.mxu0 0.0
        %2306 = vmatprep.subr.mxu0 0.0
        %2307 = vmatpush2.msra.mxu0 0.0
        %2308 = vmatprep.subr.mxu0 0.0
        %2309 = vmatpush2.msra.mxu0 0.0
        %2310 = vmatprep.subr.mxu0 0.0
        %2311 = vmatpush2.msra.mxu0 0.0
        %2312 = vmatprep.subr.mxu0 0.0
        %2313 = vmatpush2.msra.mxu0 0.0
        %2314 = vmatprep.subr.mxu0 0.0
        %2315 = vmatpush2.msra.mxu0 0.0
        %2316 = vmatprep.subr.mxu0 0.0
        %2317 = vmatpush2.msra.mxu0 0.0
        %2318 = vmatprep.subr.mxu0 0.0
        %2319 = vmatpush2.msra.mxu0 0.0
        %2320 = vmatprep.mubr.f32.mxu0 0.0
        %2321 = vmatmul.mubr.f32.gmra.mxu0 %v2245
        %v2322 = vpop.f32.mrf.mxu0
        %v2323 = vadd.f32 0.0, %v2322
        %v2324 = vpop.f32.mrf.mxu0
        %2325 = vmatprep.mubr.f32.mxu0 0.0
        %2326 = vmatmul.mubr.f32.gmra.mxu0 %v2248
        %v2327 = vpop.f32.mrf.mxu0
        %v2328 = vadd.f32 0.0, %v2327
        %v2329 = vpop.f32.mrf.mxu0
        %2330 = vmatprep.mubr.f32.mxu0 0.0
        %2331 = vmatmul.mubr.f32.gmra.mxu0 %v2251
        %v2332 = vpop.f32.mrf.mxu0
        %v2333 = vadd.f32 0.0, %v2332
        %v2334 = vpop.f32.mrf.mxu0
        %2335 = vmatprep.mubr.f32.mxu0 0.0
        %2336 = vmatmul.mubr.f32.gmra.mxu0 %v2254
        %v2337 = vpop.f32.mrf.mxu0
        %v2338 = vadd.f32 0.0, %v2337
        %v2339 = vpop.f32.mrf.mxu0
        %2340 = vdwg.mxu0
        %v2341 = vadd.f32 %v2223, %v2323
        %v2342 = vadd.f32 %v2224, %v2328
        %v2343 = vadd.f32 %v2225, %v2333
        %v2344 = vadd.f32 %v2226, %v2338
        %2345 = vrot.lane.b32.xlu0 %v1522, 125
        %v2346 = vpop.permute.xlu0 %2345
        %2347 = vrot.lane.b32.xlu0 %v1523, 125
        %v2348 = vpop.permute.xlu0 %2347
        %2349 = vrot.lane.b32.xlu0 %v1524, 125
        %v2350 = vpop.permute.xlu0 %2349
        %2351 = vrot.lane.b32.xlu0 %v1525, 125
        %v2352 = vpop.permute.xlu0 %2351
        %v2353 = vmul.f32 %v2346, %v1284
        %v2354 = vmul.f32 %v2348, %v1284
        %v2355 = vmul.f32 %v2350, %v1284
        %v2356 = vmul.f32 %v2352, %v1284
        %s2357 = scalar_lea.vmem %s233, 512 [#allocation2]
        %v2358 = vld [vmem:[%s2357] sm:$0xff]
        %v2359 = vld [vmem:[%s2357 + $0x8] sm:$0xff]
        %v2360 = vld [vmem:[%s2357 + $0x10] sm:$0xff]
        %v2361 = vld [vmem:[%s2357 + $0x18] sm:$0xff]
        %v2363 = vsel %vm432, %v2358, 0
        %v2366 = vsel %vm432, %v2359, 0
        %v2369 = vsel %vm432, %v2360, 0
        %v2372 = vsel %vm432, %v2361, 0
        %2374 = vmatprep.subr.mxu0 0.0
        %2375 = vmatpush1.msra.mxu0 0.0
        %2376 = vmatprep.subr.mxu0 0.0
        %2377 = vmatpush1.msra.mxu0 0.0
        %2378 = vmatprep.subr.mxu0 0.0
        %2379 = vmatpush1.msra.mxu0 0.0
        %2380 = vmatprep.subr.mxu0 0.0
        %2381 = vmatpush1.msra.mxu0 0.0
        %2382 = vmatprep.subr.mxu0 0.0
        %2383 = vmatpush1.msra.mxu0 0.0
        %2384 = vmatprep.subr.mxu0 0.0
        %2385 = vmatpush1.msra.mxu0 0.0
        %2386 = vmatprep.subr.mxu0 0.0
        %2387 = vmatpush1.msra.mxu0 0.0
        %2388 = vmatprep.subr.mxu0 0.0
        %2389 = vmatpush1.msra.mxu0 0.0
        %2390 = vmatprep.subr.mxu0 0.0
        %2391 = vmatpush1.msra.mxu0 0.0
        %2392 = vmatprep.subr.mxu0 0.0
        %2393 = vmatpush1.msra.mxu0 0.0
        %2394 = vmatprep.subr.mxu0 0.0
        %2395 = vmatpush1.msra.mxu0 0.0
        %2396 = vmatprep.subr.mxu0 0.0
        %2397 = vmatpush1.msra.mxu0 0.0
        %2398 = vmatprep.subr.mxu0 0.0
        %2399 = vmatpush1.msra.mxu0 %v2356
        %2400 = vmatprep.subr.mxu0 0.0
        %2401 = vmatpush1.msra.mxu0 %v2355
        %2402 = vmatprep.subr.mxu0 0.0
        %2403 = vmatpush1.msra.mxu0 %v2354
        %2404 = vmatprep.subr.mxu0 0.0
        %2405 = vmatpush1.msra.mxu0 %v2353
        %2406 = vmatprep.subr.mxu0 0.0
        %2407 = vmatpush2.msra.mxu0 0.0
        %2408 = vmatprep.subr.mxu0 0.0
        %2409 = vmatpush2.msra.mxu0 0.0
        %2410 = vmatprep.subr.mxu0 0.0
        %2411 = vmatpush2.msra.mxu0 0.0
        %2412 = vmatprep.subr.mxu0 0.0
        %2413 = vmatpush2.msra.mxu0 0.0
        %2414 = vmatprep.subr.mxu0 0.0
        %2415 = vmatpush2.msra.mxu0 0.0
        %2416 = vmatprep.subr.mxu0 0.0
        %2417 = vmatpush2.msra.mxu0 0.0
        %2418 = vmatprep.subr.mxu0 0.0
        %2419 = vmatpush2.msra.mxu0 0.0
        %2420 = vmatprep.subr.mxu0 0.0
        %2421 = vmatpush2.msra.mxu0 0.0
        %2422 = vmatprep.subr.mxu0 0.0
        %2423 = vmatpush2.msra.mxu0 0.0
        %2424 = vmatprep.subr.mxu0 0.0
        %2425 = vmatpush2.msra.mxu0 0.0
        %2426 = vmatprep.subr.mxu0 0.0
        %2427 = vmatpush2.msra.mxu0 0.0
        %2428 = vmatprep.subr.mxu0 0.0
        %2429 = vmatpush2.msra.mxu0 0.0
        %2430 = vmatprep.subr.mxu0 0.0
        %2431 = vmatpush2.msra.mxu0 0.0
        %2432 = vmatprep.subr.mxu0 0.0
        %2433 = vmatpush2.msra.mxu0 0.0
        %2434 = vmatprep.subr.mxu0 0.0
        %2435 = vmatpush2.msra.mxu0 0.0
        %2436 = vmatprep.subr.mxu0 0.0
        %2437 = vmatpush2.msra.mxu0 0.0
        %2438 = vmatprep.mubr.f32.mxu0 0.0
        %2439 = vmatmul.mubr.f32.gmra.mxu0 %v2363
        %v2440 = vpop.f32.mrf.mxu0
        %v2441 = vadd.f32 0.0, %v2440
        %v2442 = vpop.f32.mrf.mxu0
        %2443 = vmatprep.mubr.f32.mxu0 0.0
        %2444 = vmatmul.mubr.f32.gmra.mxu0 %v2366
        %v2445 = vpop.f32.mrf.mxu0
        %v2446 = vadd.f32 0.0, %v2445
        %v2447 = vpop.f32.mrf.mxu0
        %2448 = vmatprep.mubr.f32.mxu0 0.0
        %2449 = vmatmul.mubr.f32.gmra.mxu0 %v2369
        %v2450 = vpop.f32.mrf.mxu0
        %v2451 = vadd.f32 0.0, %v2450
        %v2452 = vpop.f32.mrf.mxu0
        %2453 = vmatprep.mubr.f32.mxu0 0.0
        %2454 = vmatmul.mubr.f32.gmra.mxu0 %v2372
        %v2455 = vpop.f32.mrf.mxu0
        %v2456 = vadd.f32 0.0, %v2455
        %v2457 = vpop.f32.mrf.mxu0
        %2458 = vdwg.mxu0
        %v2459 = vadd.f32 %v2341, %v2441
        %v2460 = vadd.f32 %v2342, %v2446
        %v2461 = vadd.f32 %v2343, %v2451
        %v2462 = vadd.f32 %v2344, %v2456
        %2463 = vrot.lane.b32.xlu0 %v1522, 124
        %v2464 = vpop.permute.xlu0 %2463
        %2465 = vrot.lane.b32.xlu0 %v1523, 124
        %v2466 = vpop.permute.xlu0 %2465
        %2467 = vrot.lane.b32.xlu0 %v1524, 124
        %v2468 = vpop.permute.xlu0 %2467
        %2469 = vrot.lane.b32.xlu0 %v1525, 124
        %v2470 = vpop.permute.xlu0 %2469
        %v2471 = vmul.f32 %v2464, %v1410
        %v2472 = vmul.f32 %v2466, %v1410
        %v2473 = vmul.f32 %v2468, %v1410
        %v2474 = vmul.f32 %v2470, %v1410
        %s2475 = scalar_lea.vmem %s233, 544 [#allocation2]
        %v2476 = vld [vmem:[%s2475] sm:$0xff]
        %v2477 = vld [vmem:[%s2475 + $0x8] sm:$0xff]
        %v2478 = vld [vmem:[%s2475 + $0x10] sm:$0xff]
        %v2479 = vld [vmem:[%s2475 + $0x18] sm:$0xff]
        %v2481 = vsel %vm432, %v2476, 0
        %v2484 = vsel %vm432, %v2477, 0
        %v2487 = vsel %vm432, %v2478, 0
        %v2490 = vsel %vm432, %v2479, 0
        %2492 = vmatprep.subr.mxu0 0.0
        %2493 = vmatpush1.msra.mxu0 0.0
        %2494 = vmatprep.subr.mxu0 0.0
        %2495 = vmatpush1.msra.mxu0 0.0
        %2496 = vmatprep.subr.mxu0 0.0
        %2497 = vmatpush1.msra.mxu0 0.0
        %2498 = vmatprep.subr.mxu0 0.0
        %2499 = vmatpush1.msra.mxu0 0.0
        %2500 = vmatprep.subr.mxu0 0.0
        %2501 = vmatpush1.msra.mxu0 0.0
        %2502 = vmatprep.subr.mxu0 0.0
        %2503 = vmatpush1.msra.mxu0 0.0
        %2504 = vmatprep.subr.mxu0 0.0
        %2505 = vmatpush1.msra.mxu0 0.0
        %2506 = vmatprep.subr.mxu0 0.0
        %2507 = vmatpush1.msra.mxu0 0.0
        %2508 = vmatprep.subr.mxu0 0.0
        %2509 = vmatpush1.msra.mxu0 0.0
        %2510 = vmatprep.subr.mxu0 0.0
        %2511 = vmatpush1.msra.mxu0 0.0
        %2512 = vmatprep.subr.mxu0 0.0
        %2513 = vmatpush1.msra.mxu0 0.0
        %2514 = vmatprep.subr.mxu0 0.0
        %2515 = vmatpush1.msra.mxu0 0.0
        %2516 = vmatprep.subr.mxu0 0.0
        %2517 = vmatpush1.msra.mxu0 %v2474
        %2518 = vmatprep.subr.mxu0 0.0
        %2519 = vmatpush1.msra.mxu0 %v2473
        %2520 = vmatprep.subr.mxu0 0.0
        %2521 = vmatpush1.msra.mxu0 %v2472
        %2522 = vmatprep.subr.mxu0 0.0
        %2523 = vmatpush1.msra.mxu0 %v2471
        %2524 = vmatprep.subr.mxu0 0.0
        %2525 = vmatpush2.msra.mxu0 0.0
        %2526 = vmatprep.subr.mxu0 0.0
        %2527 = vmatpush2.msra.mxu0 0.0
        %2528 = vmatprep.subr.mxu0 0.0
        %2529 = vmatpush2.msra.mxu0 0.0
        %2530 = vmatprep.subr.mxu0 0.0
        %2531 = vmatpush2.msra.mxu0 0.0
        %2532 = vmatprep.subr.mxu0 0.0
        %2533 = vmatpush2.msra.mxu0 0.0
        %2534 = vmatprep.subr.mxu0 0.0
        %2535 = vmatpush2.msra.mxu0 0.0
        %2536 = vmatprep.subr.mxu0 0.0
        %2537 = vmatpush2.msra.mxu0 0.0
        %2538 = vmatprep.subr.mxu0 0.0
        %2539 = vmatpush2.msra.mxu0 0.0
        %2540 = vmatprep.subr.mxu0 0.0
        %2541 = vmatpush2.msra.mxu0 0.0
        %2542 = vmatprep.subr.mxu0 0.0
        %2543 = vmatpush2.msra.mxu0 0.0
        %2544 = vmatprep.subr.mxu0 0.0
        %2545 = vmatpush2.msra.mxu0 0.0
        %2546 = vmatprep.subr.mxu0 0.0
        %2547 = vmatpush2.msra.mxu0 0.0
        %2548 = vmatprep.subr.mxu0 0.0
        %2549 = vmatpush2.msra.mxu0 0.0
        %2550 = vmatprep.subr.mxu0 0.0
        %2551 = vmatpush2.msra.mxu0 0.0
        %2552 = vmatprep.subr.mxu0 0.0
        %2553 = vmatpush2.msra.mxu0 0.0
        %2554 = vmatprep.subr.mxu0 0.0
        %2555 = vmatpush2.msra.mxu0 0.0
        %2556 = vmatprep.mubr.f32.mxu0 0.0
        %2557 = vmatmul.mubr.f32.gmra.mxu0 %v2481
        %v2558 = vpop.f32.mrf.mxu0
        %v2559 = vadd.f32 0.0, %v2558
        %v2560 = vpop.f32.mrf.mxu0
        %2561 = vmatprep.mubr.f32.mxu0 0.0
        %2562 = vmatmul.mubr.f32.gmra.mxu0 %v2484
        %v2563 = vpop.f32.mrf.mxu0
        %v2564 = vadd.f32 0.0, %v2563
        %v2565 = vpop.f32.mrf.mxu0
        %2566 = vmatprep.mubr.f32.mxu0 0.0
        %2567 = vmatmul.mubr.f32.gmra.mxu0 %v2487
        %v2568 = vpop.f32.mrf.mxu0
        %v2569 = vadd.f32 0.0, %v2568
        %v2570 = vpop.f32.mrf.mxu0
        %2571 = vmatprep.mubr.f32.mxu0 0.0
        %2572 = vmatmul.mubr.f32.gmra.mxu0 %v2490
        %v2573 = vpop.f32.mrf.mxu0
        %v2574 = vadd.f32 0.0, %v2573
        %v2575 = vpop.f32.mrf.mxu0
        %2576 = vdwg.mxu0
        %v2577 = vadd.f32 %v2459, %v2559
        %v2578 = vadd.f32 %v2460, %v2564
        %v2579 = vadd.f32 %v2461, %v2569
        %v2580 = vadd.f32 %v2462, %v2574
        %v2581 = vmax.f32 %v2577, 0.0
        %v2582 = vmax.f32 %v2578, 0.0
        %v2583 = vmax.f32 %v2579, 0.0
        %v2584 = vmax.f32 %v2580, 0.0
        %2585 = vst [vmem:[%s284] sm:$0xff] %v2581
        %2586 = vst [vmem:[%s284 + $0x8] sm:$0xff] %v2582
        %2587 = vst [vmem:[%s284 + $0x10] sm:$0xff] %v2583
        %2588 = vst [vmem:[%s284 + $0x18] sm:$0xff] %v2584
        %p2589 = scmp.lt.s32.totalorder %s19, 1
        %s2590 = scalar_select %p2589, %s19, 1
        %s2591 = smul.addr %s2590, 4
        %s2592 = smul.addr %s2591, 8
        %s2593 = scalar_lea.vmem %s5, %s2592
        // Predicated region
        $region45: #{forward.1} parent=39 // pred_check
          %p2594 = pneg %p157
        $region46: #{forward.1} parent=39 // pred_check_branch
          %2596 = sbr.rel (%p2594) target = $region48
        $region47: #{forward.1} parent=39 // pred_region
          _
        $region48: #{forward.1} parent=39 // pred_fallthru
          _
      $region40: #{forward.1} parent=5 // pred_fallthru
        _
      %p2597 = scmp.le.s32.totalorder 2, %s14
      // Predicated region
      $region49: #{forward.1} parent=5 // pred_check
        %p2598 = pneg %p2597
      $region50: #{forward.1} parent=5 // pred_check_branch
        %2600 = sbr.rel (%p2598) target = $region52
      $region51: #{forward.1} parent=5 // pred_region
        %s2601 = ssub.s32 %s14, 2
        // Predicated region
        $region53: #{forward.1} parent=51 // pred_check
          %p2602 = pneg %p163
        $region54: #{forward.1} parent=51 // pred_check_branch
          %2604 = sbr.rel (%p2602) target = $region56
        $region55: #{forward.1} parent=51 // pred_region
          %p2605 = scmp.lt.s32.totalorder %s20, 1
          %s2606 = scalar_select %p2605, %s20, 1
          %s2607 = smul.addr %s2606, 4
          %s2608 = smul.addr %s2607, 8
          %s2609 = scalar_lea.vmem %s5, %s2608
        $region56: #{forward.1} parent=51 // pred_fallthru
          _
      $region52: #{forward.1} parent=5 // pred_fallthru
        _
    $region6: #{forward.1} parent=1 // loop_footer
      %s18 = sadd.s32 1, %s14
    $region7: #{forward.1} parent=1 // loop_footer_branch
      %13 = sbr.rel target = $region3
    $region8: #{forward.1} parent=1 // loop_exit
      _
    %2610 = vsyncpa [#allocation3], 1
    %s2611 = scalar_lea.sflag [#allocation3], 1
    %2612 = vsyncpa %s2611, 1

</llo_original>
